<compile_context>
chip_gen: v5e
topology: v5e:2x2
jax: 0.10.0
libtpu: 0.0.40
codegen_flags: <defaults>
</compile_context>

<pallas_src>
import functools

import numpy as np

import jax
import jax.numpy as jnp
from jax import lax
from jax.experimental import pallas as pl
from jax.experimental.pallas import tpu as pltpu


def _resblock_kernel(x_ref, w_ref, bn_ref, mask_ref, o_ref, patches_ref, *, H, W, B):
    # x_ref:       (B, C, H*W)   B input images, spatial flattened on lanes
    # w_ref:       (2, C, 9*C)   bf16 conv weights (conv1, conv2), tap-major
    # bn_ref:      (4, C, 1)     f32 folded BN params: a1, b1, a2, b2
    # mask_ref:    (9, 1, B*H*W) f32 'SAME' boundary masks (per-image position)
    # o_ref:       (B, C, H*W)   output
    # patches_ref: (9*C, B*H*W)  bf16 im2col scratch (paired, aligned writes)
    C = x_ref.shape[1]
    HW = H * W
    L = B * HW

    # Lane-concatenate the B images of this step: (C, B*HW) f32.  Each piece is
    # a multiple of 128 lanes, so this is vreg placement, not data shuffling.
    if B == 1:
        x = x_ref[0].astype(jnp.float32)
    else:
        x = jnp.concatenate([x_ref[b] for b in range(B)], axis=1).astype(jnp.float32)

    a1, b1, a2, b2 = bn_ref[0], bn_ref[1], bn_ref[2], bn_ref[3]      # (C, 1) each

    # Boundary masks: load + compare once, reused by both convs (9 x (1, L)).
    valid = [mask_ref[k] != 0.0 for k in range(9)]

    def tap(t, k):
        # One im2col tap: lane-rotate by the flat spatial offset, zero the
        # out-of-image positions, cast to bf16 for the MXU / bf16 scratch.
        dh, dw = k // 3 - 1, k % 3 - 1
        d = dh * W + dw
        shifted = t if d == 0 else pltpu.roll(t, shift=(-d) % L, axis=1)
        return jnp.where(valid[k], shifted, 0.0).astype(jnp.bfloat16)

    def conv3x3(t, w_bf16):
        # Build the (9C, L) bf16 im2col matrix.  Taps are written in pairs so
        # each store is 2*C rows: with C % 8 == 0 that is a whole 16-sublane
        # bf16 tile -> unmasked, aligned stores (last lone tap is half a tile).
        for kp in range(4):
            k = 2 * kp
            patches_ref[k * C:(k + 2) * C, :] = jnp.concatenate(
                [tap(t, k), tap(t, k + 1)], axis=0)
        patches_ref[8 * C:9 * C, :] = tap(t, 8)
        # Single MXU matmul per conv: K = 9*C, lane-dense N = B*H*W output.
        return jnp.dot(w_bf16, patches_ref[...], preferred_element_type=jnp.float32)

    t1 = jnp.maximum(x * a1 + b1, 0.0)                      # BN1 (eval) + ReLU
    y1 = conv3x3(t1, w_ref[0])
    t2 = jnp.maximum(y1 * a2 + b2, 0.0)                     # BN2 (eval) + ReLU
    y2 = conv3x3(t2, w_ref[1])

    out = y2 + x                                            # residual add (f32)
    for b in range(B):                                      # lane-dense stores
        o_ref[b] = out[:, b * HW:(b + 1) * HW].astype(o_ref.dtype)


@functools.partial(jax.jit, static_argnames=("images_per_step",))
def residual_block_nchw(x_nchw, w1_oihw, w2_oihw, a1, b1, a2, b2,
                        images_per_step=None):
    """x_nchw: (N, C, H, W). Conv weights in PyTorch OIHW layout. Returns NCHW."""
    N, C, H, W = x_nchw.shape
    HW = H * W

    # Default: keep two grid steps when the batch splits evenly (one per v7x
    # TensorCore); a 1-TC chip (v5e/v6e) would prefer images_per_step = N.
    if images_per_step is None:
        images_per_step = N // 2 if (N % 2 == 0 and N >= 2) else N
    B = images_per_step
    if N % B != 0:
        B = 1
    G = N // B
    L = B * HW

    x = x_nchw.reshape(N, C, HW)                            # free reshape, no transpose

    def to_mat(w):                                          # OIHW -> (Cout, 9*Cin), tap-major
        return jnp.transpose(w, (0, 2, 3, 1)).reshape(C, 9 * C)

    w_stack = jnp.stack([to_mat(w1_oihw), to_mat(w2_oihw)]).astype(jnp.bfloat16)
    bn = jnp.stack([a1, b1, a2, b2]).astype(jnp.float32).reshape(4, C, 1)

    # 'SAME' boundary masks for the 9 taps, per-image position (pos % HW), as a
    # trace-time numpy constant -> zero in-kernel VALU cost for mask building.
    pos = np.arange(L, dtype=np.int32) % HW
    row, col = pos // W, pos % W
    m = np.stack([
        ((row + k // 3 - 1) >= 0) & ((row + k // 3 - 1) < H)
        & ((col + k % 3 - 1) >= 0) & ((col + k % 3 - 1) < W)
        for k in range(9)
    ]).astype(np.float32)
    mask = jnp.asarray(m.reshape(9, 1, L))

    # VMEM working set per grid step: bf16 im2col scratch + double-buffered f32
    # x/out blocks + constant operands.  Cap at 40 MiB so v7x (64 MiB physical)
    # keeps headroom for Mosaic internal scratch.
    work = (9 * C * L * 2                       # bf16 im2col scratch
            + 2 * 2 * (B * C * HW * 4)          # x + out blocks, double-buffered
            + 2 * (2 * C * 9 * C * 2            # conv weights
                   + 4 * C * 4 + 9 * L * 4))    # BN params + boundary masks
    vmem_limit = int(min(max(2 * work + (2 << 20), 16 << 20), 40 << 20))

    kernel = functools.partial(_resblock_kernel, H=H, W=W, B=B)

    out = pl.pallas_call(
        kernel,
        out_shape=jax.ShapeDtypeStruct((N, C, HW), x_nchw.dtype),
        grid_spec=pltpu.PrefetchScalarGridSpec(
            num_scalar_prefetch=0,
            grid=(G,),
            in_specs=[
                pl.BlockSpec((B, C, HW), lambda g: (g, 0, 0)),       # B images
                pl.BlockSpec((2, C, 9 * C), lambda g: (0, 0, 0)),    # conv weights
                pl.BlockSpec((4, C, 1), lambda g: (0, 0, 0)),        # BN params
                pl.BlockSpec((9, 1, L), lambda g: (0, 0, 0)),        # boundary masks
            ],
            out_specs=pl.BlockSpec((B, C, HW), lambda g: (g, 0, 0)),
            scratch_shapes=[pltpu.VMEM((9 * C, L), jnp.bfloat16)],   # bf16 im2col
        ),
        compiler_params=pltpu.CompilerParams(
            dimension_semantics=("parallel",),
            vmem_limit_bytes=vmem_limit,
        ),
    )(x, w_stack, bn, mask)

    return out.reshape(N, C, H, W)


def _reference_nchw(x_nchw, w1_oihw, w2_oihw, a1, b1, a2, b2):
    """Pure-JAX reference (bf16 conv operands / f32 accumulation, matching kernel)."""
    x = x_nchw.astype(jnp.float32)
    dn = ('NCHW', 'OIHW', 'NCHW')

    def bn_relu(v, a, b):
        return jnp.maximum(v * a[None, :, None, None] + b[None, :, None, None], 0.0)

    t1 = bn_relu(x, a1, b1)
    y1 = lax.conv_general_dilated(t1.astype(jnp.bfloat16), w1_oihw.astype(jnp.bfloat16),
                                  (1, 1), 'SAME', dimension_numbers=dn,
                                  preferred_element_type=jnp.float32)
    t2 = bn_relu(y1, a2, b2)
    y2 = lax.conv_general_dilated(t2.astype(jnp.bfloat16), w2_oihw.astype(jnp.bfloat16),
                                  (1, 1), 'SAME', dimension_numbers=dn,
                                  preferred_element_type=jnp.float32)
    return y2 + x


if __name__ == "__main__":
    N, C, H, W = 4, 8, 16, 16
    key = jax.random.PRNGKey(0)
    (kx, kw1, kw2, kg1, kb1, km1, kv1, kg2, kb2, km2, kv2) = jax.random.split(key, 11)

    x = jax.random.normal(kx, (N, C, H, W), jnp.float32)          # NCHW input

    # conv3x3 weights in PyTorch OIHW layout (Cout, Cin, 3, 3), bias=False
    w1 = jax.random.normal(kw1, (C, C, 3, 3), jnp.float32) * 0.1
    w2 = jax.random.normal(kw2, (C, C, 3, 3), jnp.float32) * 0.1

    eps = 1e-5
    # BatchNorm2d params (shape (C,) each): gamma, beta, running_mean, running_var
    gamma1 = 1.0 + 0.1 * jax.random.normal(kg1, (C,), jnp.float32)
    beta1 = 0.1 * jax.random.normal(kb1, (C,), jnp.float32)
    mean1 = 0.1 * jax.random.normal(km1, (C,), jnp.float32)
    var1 = 0.5 + jnp.abs(jax.random.normal(kv1, (C,), jnp.float32))

    gamma2 = 1.0 + 0.1 * jax.random.normal(kg2, (C,), jnp.float32)
    beta2 = 0.1 * jax.random.normal(kb2, (C,), jnp.float32)
    mean2 = 0.1 * jax.random.normal(km2, (C,), jnp.float32)
    var2 = 0.5 + jnp.abs(jax.random.normal(kv2, (C,), jnp.float32))

    # fold BN (eval mode) into per-channel scale/shift
    a1 = gamma1 / jnp.sqrt(var1 + eps)
    b1 = beta1 - mean1 * a1
    a2 = gamma2 / jnp.sqrt(var2 + eps)
    b2 = beta2 - mean2 * a2

    ref = _reference_nchw(x, w1, w2, a1, b1, a2, b2)

    # Default: 2 images per grid step (2 steps -> both v7x TensorCores busy).
    out = residual_block_nchw(x, w1, w2, a1, b1, a2, b2)
    out = jax.block_until_ready(out)
    assert out.shape == (N, C, H, W)
    max_err = float(jnp.max(jnp.abs(out - ref)))
    assert jnp.allclose(out, ref, atol=5e-3, rtol=5e-3), max_err

    # Also exercise the per-image (B=1) path.
    out1 = residual_block_nchw(x, w1, w2, a1, b1, a2, b2, images_per_step=1)
    out1 = jax.block_until_ready(out1)
    max_err1 = float(jnp.max(jnp.abs(out1 - ref)))
    assert jnp.allclose(out1, ref, atol=5e-3, rtol=5e-3), max_err1

    print("KERNEL_OK")
</pallas_src>

<mosaic_0001>
module attributes {stable_mosaic.version = 11 : i64} {
  func.func @_resblock_kernel(%arg0: i32, %arg1: memref<2x8x256xf32, #tpu.memory_space<vmem>>, %arg2: memref<2x8x72xbf16, #tpu.memory_space<vmem>>, %arg3: memref<4x8x1xf32, #tpu.memory_space<vmem>>, %arg4: memref<9x1x512xf32, #tpu.memory_space<vmem>>, %arg5: memref<2x8x256xf32, #tpu.memory_space<vmem>>, %arg6: memref<72x512xbf16, #tpu.memory_space<vmem>>) attributes {dimension_semantics = [#tpu.dimension_semantics<parallel>], iteration_bounds = array<i64: 2>, scalar_prefetch = 0 : i64, scratch_operands = 1 : i64, tpu.core_type = #tpu.core_type<tc>, window_params = [{transform_indices = @transform_0, window_bounds = array<i64: 2, 8, 256>}, {pipeline_mode = #tpu.pipeline_mode<synchronous>, transform_indices = @transform_1, window_bounds = array<i64: 2, 8, 72>}, {pipeline_mode = #tpu.pipeline_mode<synchronous>, transform_indices = @transform_2, window_bounds = array<i64: 4, 8, 1>}, {pipeline_mode = #tpu.pipeline_mode<synchronous>, transform_indices = @transform_3, window_bounds = array<i64: 9, 1, 512>}, {transform_indices = @transform_4, window_bounds = array<i64: 2, 8, 256>}]} {
    %c0 = arith.constant 0 : index
    %c0_0 = arith.constant 0 : index
    %c0_1 = arith.constant 0 : index
    %0 = vector.load %arg1[%c0, %c0_0, %c0_1] : memref<2x8x256xf32, #tpu.memory_space<vmem>>, vector<1x8x256xf32>
    %1 = vector.shape_cast %0 : vector<1x8x256xf32> to vector<8x256xf32>
    %c1 = arith.constant 1 : index
    %c0_2 = arith.constant 0 : index
    %c0_3 = arith.constant 0 : index
    %2 = vector.load %arg1[%c1, %c0_2, %c0_3] : memref<2x8x256xf32, #tpu.memory_space<vmem>>, vector<1x8x256xf32>
    %3 = vector.shape_cast %2 : vector<1x8x256xf32> to vector<8x256xf32>
    %4 = tpu.concatenate %1, %3 in 1 : vector<8x256xf32>, vector<8x256xf32> -> vector<8x512xf32>
    %c0_4 = arith.constant 0 : index
    %c0_5 = arith.constant 0 : index
    %c0_6 = arith.constant 0 : index
    %5 = vector.load %arg3[%c0_4, %c0_5, %c0_6] : memref<4x8x1xf32, #tpu.memory_space<vmem>>, vector<1x8x1xf32>
    %6 = vector.shape_cast %5 : vector<1x8x1xf32> to vector<8x1xf32>
    %c1_7 = arith.constant 1 : index
    %c0_8 = arith.constant 0 : index
    %c0_9 = arith.constant 0 : index
    %7 = vector.load %arg3[%c1_7, %c0_8, %c0_9] : memref<4x8x1xf32, #tpu.memory_space<vmem>>, vector<1x8x1xf32>
    %8 = vector.shape_cast %7 : vector<1x8x1xf32> to vector<8x1xf32>
    %c2 = arith.constant 2 : index
    %c0_10 = arith.constant 0 : index
    %c0_11 = arith.constant 0 : index
    %9 = vector.load %arg3[%c2, %c0_10, %c0_11] : memref<4x8x1xf32, #tpu.memory_space<vmem>>, vector<1x8x1xf32>
    %10 = vector.shape_cast %9 : vector<1x8x1xf32> to vector<8x1xf32>
    %c3 = arith.constant 3 : index
    %c0_12 = arith.constant 0 : index
    %c0_13 = arith.constant 0 : index
    %11 = vector.load %arg3[%c3, %c0_12, %c0_13] : memref<4x8x1xf32, #tpu.memory_space<vmem>>, vector<1x8x1xf32>
    %12 = vector.shape_cast %11 : vector<1x8x1xf32> to vector<8x1xf32>
    %c0_14 = arith.constant 0 : index
    %c0_15 = arith.constant 0 : index
    %c0_16 = arith.constant 0 : index
    %13 = vector.load %arg4[%c0_14, %c0_15, %c0_16] : memref<9x1x512xf32, #tpu.memory_space<vmem>>, vector<1x1x512xf32>
    %14 = vector.shape_cast %13 : vector<1x1x512xf32> to vector<1x512xf32>
    %cst = arith.constant 0.000000e+00 : f32
    %15 = vector.broadcast %cst : f32 to vector<1x512xf32>
    %16 = arith.cmpf one, %14, %15 : vector<1x512xf32>
    %c1_17 = arith.constant 1 : index
    %c0_18 = arith.constant 0 : index
    %c0_19 = arith.constant 0 : index
    %17 = vector.load %arg4[%c1_17, %c0_18, %c0_19] : memref<9x1x512xf32, #tpu.memory_space<vmem>>, vector<1x1x512xf32>
    %18 = vector.shape_cast %17 : vector<1x1x512xf32> to vector<1x512xf32>
    %cst_20 = arith.constant 0.000000e+00 : f32
    %19 = vector.broadcast %cst_20 : f32 to vector<1x512xf32>
    %20 = arith.cmpf one, %18, %19 : vector<1x512xf32>
    %c2_21 = arith.constant 2 : index
    %c0_22 = arith.constant 0 : index
    %c0_23 = arith.constant 0 : index
    %21 = vector.load %arg4[%c2_21, %c0_22, %c0_23] : memref<9x1x512xf32, #tpu.memory_space<vmem>>, vector<1x1x512xf32>
    %22 = vector.shape_cast %21 : vector<1x1x512xf32> to vector<1x512xf32>
    %cst_24 = arith.constant 0.000000e+00 : f32
    %23 = vector.broadcast %cst_24 : f32 to vector<1x512xf32>
    %24 = arith.cmpf one, %22, %23 : vector<1x512xf32>
    %c3_25 = arith.constant 3 : index
    %c0_26 = arith.constant 0 : index
    %c0_27 = arith.constant 0 : index
    %25 = vector.load %arg4[%c3_25, %c0_26, %c0_27] : memref<9x1x512xf32, #tpu.memory_space<vmem>>, vector<1x1x512xf32>
    %26 = vector.shape_cast %25 : vector<1x1x512xf32> to vector<1x512xf32>
    %cst_28 = arith.constant 0.000000e+00 : f32
    %27 = vector.broadcast %cst_28 : f32 to vector<1x512xf32>
    %28 = arith.cmpf one, %26, %27 : vector<1x512xf32>
    %c4 = arith.constant 4 : index
    %c0_29 = arith.constant 0 : index
    %c0_30 = arith.constant 0 : index
    %29 = vector.load %arg4[%c4, %c0_29, %c0_30] : memref<9x1x512xf32, #tpu.memory_space<vmem>>, vector<1x1x512xf32>
    %30 = vector.shape_cast %29 : vector<1x1x512xf32> to vector<1x512xf32>
    %cst_31 = arith.constant 0.000000e+00 : f32
    %31 = vector.broadcast %cst_31 : f32 to vector<1x512xf32>
    %32 = arith.cmpf one, %30, %31 : vector<1x512xf32>
    %c5 = arith.constant 5 : index
    %c0_32 = arith.constant 0 : index
    %c0_33 = arith.constant 0 : index
    %33 = vector.load %arg4[%c5, %c0_32, %c0_33] : memref<9x1x512xf32, #tpu.memory_space<vmem>>, vector<1x1x512xf32>
    %34 = vector.shape_cast %33 : vector<1x1x512xf32> to vector<1x512xf32>
    %cst_34 = arith.constant 0.000000e+00 : f32
    %35 = vector.broadcast %cst_34 : f32 to vector<1x512xf32>
    %36 = arith.cmpf one, %34, %35 : vector<1x512xf32>
    %c6 = arith.constant 6 : index
    %c0_35 = arith.constant 0 : index
    %c0_36 = arith.constant 0 : index
    %37 = vector.load %arg4[%c6, %c0_35, %c0_36] : memref<9x1x512xf32, #tpu.memory_space<vmem>>, vector<1x1x512xf32>
    %38 = vector.shape_cast %37 : vector<1x1x512xf32> to vector<1x512xf32>
    %cst_37 = arith.constant 0.000000e+00 : f32
    %39 = vector.broadcast %cst_37 : f32 to vector<1x512xf32>
    %40 = arith.cmpf one, %38, %39 : vector<1x512xf32>
    %c7 = arith.constant 7 : index
    %c0_38 = arith.constant 0 : index
    %c0_39 = arith.constant 0 : index
    %41 = vector.load %arg4[%c7, %c0_38, %c0_39] : memref<9x1x512xf32, #tpu.memory_space<vmem>>, vector<1x1x512xf32>
    %42 = vector.shape_cast %41 : vector<1x1x512xf32> to vector<1x512xf32>
    %cst_40 = arith.constant 0.000000e+00 : f32
    %43 = vector.broadcast %cst_40 : f32 to vector<1x512xf32>
    %44 = arith.cmpf one, %42, %43 : vector<1x512xf32>
    %c8 = arith.constant 8 : index
    %c0_41 = arith.constant 0 : index
    %c0_42 = arith.constant 0 : index
    %45 = vector.load %arg4[%c8, %c0_41, %c0_42] : memref<9x1x512xf32, #tpu.memory_space<vmem>>, vector<1x1x512xf32>
    %46 = vector.shape_cast %45 : vector<1x1x512xf32> to vector<1x512xf32>
    %cst_43 = arith.constant 0.000000e+00 : f32
    %47 = vector.broadcast %cst_43 : f32 to vector<1x512xf32>
    %48 = arith.cmpf one, %46, %47 : vector<1x512xf32>
    %49 = vector.broadcast %6 : vector<8x1xf32> to vector<8x512xf32>
    %50 = arith.mulf %4, %49 : vector<8x512xf32>
    %51 = vector.broadcast %8 : vector<8x1xf32> to vector<8x512xf32>
    %52 = arith.addf %50, %51 : vector<8x512xf32>
    %cst_44 = arith.constant 0.000000e+00 : f32
    %53 = vector.broadcast %cst_44 : f32 to vector<8x512xf32>
    %54 = arith.maximumf %52, %53 : vector<8x512xf32>
    %c0_45 = arith.constant 0 : index
    %c0_46 = arith.constant 0 : index
    %c0_47 = arith.constant 0 : index
    %55 = vector.load %arg2[%c0_45, %c0_46, %c0_47] : memref<2x8x72xbf16, #tpu.memory_space<vmem>>, vector<1x8x72xbf16>
    %56 = vector.shape_cast %55 : vector<1x8x72xbf16> to vector<8x72xbf16>
    %c17_i32 = arith.constant 17 : i32
    %57 = tpu.dynamic_rotate %54 by %c17_i32 dim 1 : vector<8x512xf32>, i32 -> vector<8x512xf32>
    %cst_48 = arith.constant 0.000000e+00 : f32
    %58 = vector.shape_cast %16 : vector<1x512xi1> to vector<1x512xi1>
    %59 = vector.broadcast %58 : vector<1x512xi1> to vector<8x512xi1>
    %60 = vector.broadcast %cst_48 : f32 to vector<8x512xf32>
    %61 = arith.select %59, %57, %60 : vector<8x512xi1>, vector<8x512xf32>
    %62 = arith.truncf %61 : vector<8x512xf32> to vector<8x512xbf16>
    %c16_i32 = arith.constant 16 : i32
    %63 = tpu.dynamic_rotate %54 by %c16_i32 dim 1 : vector<8x512xf32>, i32 -> vector<8x512xf32>
    %cst_49 = arith.constant 0.000000e+00 : f32
    %64 = vector.shape_cast %20 : vector<1x512xi1> to vector<1x512xi1>
    %65 = vector.broadcast %64 : vector<1x512xi1> to vector<8x512xi1>
    %66 = vector.broadcast %cst_49 : f32 to vector<8x512xf32>
    %67 = arith.select %65, %63, %66 : vector<8x512xi1>, vector<8x512xf32>
    %68 = arith.truncf %67 : vector<8x512xf32> to vector<8x512xbf16>
    %69 = tpu.concatenate %62, %68 in 0 : vector<8x512xbf16>, vector<8x512xbf16> -> vector<16x512xbf16>
    %c0_50 = arith.constant 0 : index
    %c0_51 = arith.constant 0 : index
    %70 = vector.load %arg6[%c0_50, %c0_51] : memref<72x512xbf16, #tpu.memory_space<vmem>>, vector<16x512xbf16>
    tpu.vector_store %arg6[%c0_50, %c0_51], %69 {strides = array<i32>} : memref<72x512xbf16, #tpu.memory_space<vmem>>, vector<16x512xbf16>,
    %c15_i32 = arith.constant 15 : i32
    %71 = tpu.dynamic_rotate %54 by %c15_i32 dim 1 : vector<8x512xf32>, i32 -> vector<8x512xf32>
    %cst_52 = arith.constant 0.000000e+00 : f32
    %72 = vector.shape_cast %24 : vector<1x512xi1> to vector<1x512xi1>
    %73 = vector.broadcast %72 : vector<1x512xi1> to vector<8x512xi1>
    %74 = vector.broadcast %cst_52 : f32 to vector<8x512xf32>
    %75 = arith.select %73, %71, %74 : vector<8x512xi1>, vector<8x512xf32>
    %76 = arith.truncf %75 : vector<8x512xf32> to vector<8x512xbf16>
    %c1_i32 = arith.constant 1 : i32
    %77 = tpu.dynamic_rotate %54 by %c1_i32 dim 1 : vector<8x512xf32>, i32 -> vector<8x512xf32>
    %cst_53 = arith.constant 0.000000e+00 : f32
    %78 = vector.shape_cast %28 : vector<1x512xi1> to vector<1x512xi1>
    %79 = vector.broadcast %78 : vector<1x512xi1> to vector<8x512xi1>
    %80 = vector.broadcast %cst_53 : f32 to vector<8x512xf32>
    %81 = arith.select %79, %77, %80 : vector<8x512xi1>, vector<8x512xf32>
    %82 = arith.truncf %81 : vector<8x512xf32> to vector<8x512xbf16>
    %83 = tpu.concatenate %76, %82 in 0 : vector<8x512xbf16>, vector<8x512xbf16> -> vector<16x512xbf16>
    %c16 = arith.constant 16 : index
    %c0_54 = arith.constant 0 : index
    %84 = vector.load %arg6[%c16, %c0_54] : memref<72x512xbf16, #tpu.memory_space<vmem>>, vector<16x512xbf16>
    tpu.vector_store %arg6[%c16, %c0_54], %83 {strides = array<i32>} : memref<72x512xbf16, #tpu.memory_space<vmem>>, vector<16x512xbf16>,
    %cst_55 = arith.constant 0.000000e+00 : f32
    %85 = vector.shape_cast %32 : vector<1x512xi1> to vector<1x512xi1>
    %86 = vector.broadcast %85 : vector<1x512xi1> to vector<8x512xi1>
    %87 = vector.broadcast %cst_55 : f32 to vector<8x512xf32>
    %88 = arith.select %86, %54, %87 : vector<8x512xi1>, vector<8x512xf32>
    %89 = arith.truncf %88 : vector<8x512xf32> to vector<8x512xbf16>
    %c511_i32 = arith.constant 511 : i32
    %90 = tpu.dynamic_rotate %54 by %c511_i32 dim 1 : vector<8x512xf32>, i32 -> vector<8x512xf32>
    %cst_56 = arith.constant 0.000000e+00 : f32
    %91 = vector.shape_cast %36 : vector<1x512xi1> to vector<1x512xi1>
    %92 = vector.broadcast %91 : vector<1x512xi1> to vector<8x512xi1>
    %93 = vector.broadcast %cst_56 : f32 to vector<8x512xf32>
    %94 = arith.select %92, %90, %93 : vector<8x512xi1>, vector<8x512xf32>
    %95 = arith.truncf %94 : vector<8x512xf32> to vector<8x512xbf16>
    %96 = tpu.concatenate %89, %95 in 0 : vector<8x512xbf16>, vector<8x512xbf16> -> vector<16x512xbf16>
    %c32 = arith.constant 32 : index
    %c0_57 = arith.constant 0 : index
    %97 = vector.load %arg6[%c32, %c0_57] : memref<72x512xbf16, #tpu.memory_space<vmem>>, vector<16x512xbf16>
    tpu.vector_store %arg6[%c32, %c0_57], %96 {strides = array<i32>} : memref<72x512xbf16, #tpu.memory_space<vmem>>, vector<16x512xbf16>,
    %c497_i32 = arith.constant 497 : i32
    %98 = tpu.dynamic_rotate %54 by %c497_i32 dim 1 : vector<8x512xf32>, i32 -> vector<8x512xf32>
    %cst_58 = arith.constant 0.000000e+00 : f32
    %99 = vector.shape_cast %40 : vector<1x512xi1> to vector<1x512xi1>
    %100 = vector.broadcast %99 : vector<1x512xi1> to vector<8x512xi1>
    %101 = vector.broadcast %cst_58 : f32 to vector<8x512xf32>
    %102 = arith.select %100, %98, %101 : vector<8x512xi1>, vector<8x512xf32>
    %103 = arith.truncf %102 : vector<8x512xf32> to vector<8x512xbf16>
    %c496_i32 = arith.constant 496 : i32
    %104 = tpu.dynamic_rotate %54 by %c496_i32 dim 1 : vector<8x512xf32>, i32 -> vector<8x512xf32>
    %cst_59 = arith.constant 0.000000e+00 : f32
    %105 = vector.shape_cast %44 : vector<1x512xi1> to vector<1x512xi1>
    %106 = vector.broadcast %105 : vector<1x512xi1> to vector<8x512xi1>
    %107 = vector.broadcast %cst_59 : f32 to vector<8x512xf32>
    %108 = arith.select %106, %104, %107 : vector<8x512xi1>, vector<8x512xf32>
    %109 = arith.truncf %108 : vector<8x512xf32> to vector<8x512xbf16>
    %110 = tpu.concatenate %103, %109 in 0 : vector<8x512xbf16>, vector<8x512xbf16> -> vector<16x512xbf16>
    %c48 = arith.constant 48 : index
    %c0_60 = arith.constant 0 : index
    %111 = vector.load %arg6[%c48, %c0_60] : memref<72x512xbf16, #tpu.memory_space<vmem>>, vector<16x512xbf16>
    tpu.vector_store %arg6[%c48, %c0_60], %110 {strides = array<i32>} : memref<72x512xbf16, #tpu.memory_space<vmem>>, vector<16x512xbf16>,
    %c495_i32 = arith.constant 495 : i32
    %112 = tpu.dynamic_rotate %54 by %c495_i32 dim 1 : vector<8x512xf32>, i32 -> vector<8x512xf32>
    %cst_61 = arith.constant 0.000000e+00 : f32
    %113 = vector.shape_cast %48 : vector<1x512xi1> to vector<1x512xi1>
    %114 = vector.broadcast %113 : vector<1x512xi1> to vector<8x512xi1>
    %115 = vector.broadcast %cst_61 : f32 to vector<8x512xf32>
    %116 = arith.select %114, %112, %115 : vector<8x512xi1>, vector<8x512xf32>
    %117 = arith.truncf %116 : vector<8x512xf32> to vector<8x512xbf16>
    %c64 = arith.constant 64 : index
    %c0_62 = arith.constant 0 : index
    %118 = vector.load %arg6[%c64, %c0_62] : memref<72x512xbf16, #tpu.memory_space<vmem>>, vector<8x512xbf16>
    tpu.vector_store %arg6[%c64, %c0_62], %117 {strides = array<i32>} : memref<72x512xbf16, #tpu.memory_space<vmem>>, vector<8x512xbf16>,
    %c0_63 = arith.constant 0 : index
    %c0_64 = arith.constant 0 : index
    %119 = vector.load %arg6[%c0_63, %c0_64] : memref<72x512xbf16, #tpu.memory_space<vmem>>, vector<72x512xbf16>
    %cst_65 = arith.constant dense<0.000000e+00> : vector<8x512xf32>
    %120 = tpu.matmul %56, %119, %cst_65 {dimension_numbers = #tpu.dot_dimension_numbers<[1], [0], [0], [1], [0, 0, 1, 1], [], []>} : vector<8x72xbf16>, vector<72x512xbf16>, vector<8x512xf32> -> vector<8x512xf32>
    %121 = vector.broadcast %10 : vector<8x1xf32> to vector<8x512xf32>
    %122 = arith.mulf %120, %121 : vector<8x512xf32>
    %123 = vector.broadcast %12 : vector<8x1xf32> to vector<8x512xf32>
    %124 = arith.addf %122, %123 : vector<8x512xf32>
    %cst_66 = arith.constant 0.000000e+00 : f32
    %125 = vector.broadcast %cst_66 : f32 to vector<8x512xf32>
    %126 = arith.maximumf %124, %125 : vector<8x512xf32>
    %c1_67 = arith.constant 1 : index
    %c0_68 = arith.constant 0 : index
    %c0_69 = arith.constant 0 : index
    %127 = vector.load %arg2[%c1_67, %c0_68, %c0_69] : memref<2x8x72xbf16, #tpu.memory_space<vmem>>, vector<1x8x72xbf16>
    %128 = vector.shape_cast %127 : vector<1x8x72xbf16> to vector<8x72xbf16>
    %c17_i32_70 = arith.constant 17 : i32
    %129 = tpu.dynamic_rotate %126 by %c17_i32_70 dim 1 : vector<8x512xf32>, i32 -> vector<8x512xf32>
    %cst_71 = arith.constant 0.000000e+00 : f32
    %130 = vector.shape_cast %16 : vector<1x512xi1> to vector<1x512xi1>
    %131 = vector.broadcast %130 : vector<1x512xi1> to vector<8x512xi1>
    %132 = vector.broadcast %cst_71 : f32 to vector<8x512xf32>
    %133 = arith.select %131, %129, %132 : vector<8x512xi1>, vector<8x512xf32>
    %134 = arith.truncf %133 : vector<8x512xf32> to vector<8x512xbf16>
    %c16_i32_72 = arith.constant 16 : i32
    %135 = tpu.dynamic_rotate %126 by %c16_i32_72 dim 1 : vector<8x512xf32>, i32 -> vector<8x512xf32>
    %cst_73 = arith.constant 0.000000e+00 : f32
    %136 = vector.shape_cast %20 : vector<1x512xi1> to vector<1x512xi1>
    %137 = vector.broadcast %136 : vector<1x512xi1> to vector<8x512xi1>
    %138 = vector.broadcast %cst_73 : f32 to vector<8x512xf32>
    %139 = arith.select %137, %135, %138 : vector<8x512xi1>, vector<8x512xf32>
    %140 = arith.truncf %139 : vector<8x512xf32> to vector<8x512xbf16>
    %141 = tpu.concatenate %134, %140 in 0 : vector<8x512xbf16>, vector<8x512xbf16> -> vector<16x512xbf16>
    %c0_74 = arith.constant 0 : index
    %c0_75 = arith.constant 0 : index
    %142 = vector.load %arg6[%c0_74, %c0_75] : memref<72x512xbf16, #tpu.memory_space<vmem>>, vector<16x512xbf16>
    tpu.vector_store %arg6[%c0_74, %c0_75], %141 {strides = array<i32>} : memref<72x512xbf16, #tpu.memory_space<vmem>>, vector<16x512xbf16>,
    %c15_i32_76 = arith.constant 15 : i32
    %143 = tpu.dynamic_rotate %126 by %c15_i32_76 dim 1 : vector<8x512xf32>, i32 -> vector<8x512xf32>
    %cst_77 = arith.constant 0.000000e+00 : f32
    %144 = vector.shape_cast %24 : vector<1x512xi1> to vector<1x512xi1>
    %145 = vector.broadcast %144 : vector<1x512xi1> to vector<8x512xi1>
    %146 = vector.broadcast %cst_77 : f32 to vector<8x512xf32>
    %147 = arith.select %145, %143, %146 : vector<8x512xi1>, vector<8x512xf32>
    %148 = arith.truncf %147 : vector<8x512xf32> to vector<8x512xbf16>
    %c1_i32_78 = arith.constant 1 : i32
    %149 = tpu.dynamic_rotate %126 by %c1_i32_78 dim 1 : vector<8x512xf32>, i32 -> vector<8x512xf32>
    %cst_79 = arith.constant 0.000000e+00 : f32
    %150 = vector.shape_cast %28 : vector<1x512xi1> to vector<1x512xi1>
    %151 = vector.broadcast %150 : vector<1x512xi1> to vector<8x512xi1>
    %152 = vector.broadcast %cst_79 : f32 to vector<8x512xf32>
    %153 = arith.select %151, %149, %152 : vector<8x512xi1>, vector<8x512xf32>
    %154 = arith.truncf %153 : vector<8x512xf32> to vector<8x512xbf16>
    %155 = tpu.concatenate %148, %154 in 0 : vector<8x512xbf16>, vector<8x512xbf16> -> vector<16x512xbf16>
    %c16_80 = arith.constant 16 : index
    %c0_81 = arith.constant 0 : index
    %156 = vector.load %arg6[%c16_80, %c0_81] : memref<72x512xbf16, #tpu.memory_space<vmem>>, vector<16x512xbf16>
    tpu.vector_store %arg6[%c16_80, %c0_81], %155 {strides = array<i32>} : memref<72x512xbf16, #tpu.memory_space<vmem>>, vector<16x512xbf16>,
    %cst_82 = arith.constant 0.000000e+00 : f32
    %157 = vector.shape_cast %32 : vector<1x512xi1> to vector<1x512xi1>
    %158 = vector.broadcast %157 : vector<1x512xi1> to vector<8x512xi1>
    %159 = vector.broadcast %cst_82 : f32 to vector<8x512xf32>
    %160 = arith.select %158, %126, %159 : vector<8x512xi1>, vector<8x512xf32>
    %161 = arith.truncf %160 : vector<8x512xf32> to vector<8x512xbf16>
    %c511_i32_83 = arith.constant 511 : i32
    %162 = tpu.dynamic_rotate %126 by %c511_i32_83 dim 1 : vector<8x512xf32>, i32 -> vector<8x512xf32>
    %cst_84 = arith.constant 0.000000e+00 : f32
    %163 = vector.shape_cast %36 : vector<1x512xi1> to vector<1x512xi1>
    %164 = vector.broadcast %163 : vector<1x512xi1> to vector<8x512xi1>
    %165 = vector.broadcast %cst_84 : f32 to vector<8x512xf32>
    %166 = arith.select %164, %162, %165 : vector<8x512xi1>, vector<8x512xf32>
    %167 = arith.truncf %166 : vector<8x512xf32> to vector<8x512xbf16>
    %168 = tpu.concatenate %161, %167 in 0 : vector<8x512xbf16>, vector<8x512xbf16> -> vector<16x512xbf16>
    %c32_85 = arith.constant 32 : index
    %c0_86 = arith.constant 0 : index
    %169 = vector.load %arg6[%c32_85, %c0_86] : memref<72x512xbf16, #tpu.memory_space<vmem>>, vector<16x512xbf16>
    tpu.vector_store %arg6[%c32_85, %c0_86], %168 {strides = array<i32>} : memref<72x512xbf16, #tpu.memory_space<vmem>>, vector<16x512xbf16>,
    %c497_i32_87 = arith.constant 497 : i32
    %170 = tpu.dynamic_rotate %126 by %c497_i32_87 dim 1 : vector<8x512xf32>, i32 -> vector<8x512xf32>
    %cst_88 = arith.constant 0.000000e+00 : f32
    %171 = vector.shape_cast %40 : vector<1x512xi1> to vector<1x512xi1>
    %172 = vector.broadcast %171 : vector<1x512xi1> to vector<8x512xi1>
    %173 = vector.broadcast %cst_88 : f32 to vector<8x512xf32>
    %174 = arith.select %172, %170, %173 : vector<8x512xi1>, vector<8x512xf32>
    %175 = arith.truncf %174 : vector<8x512xf32> to vector<8x512xbf16>
    %c496_i32_89 = arith.constant 496 : i32
    %176 = tpu.dynamic_rotate %126 by %c496_i32_89 dim 1 : vector<8x512xf32>, i32 -> vector<8x512xf32>
    %cst_90 = arith.constant 0.000000e+00 : f32
    %177 = vector.shape_cast %44 : vector<1x512xi1> to vector<1x512xi1>
    %178 = vector.broadcast %177 : vector<1x512xi1> to vector<8x512xi1>
    %179 = vector.broadcast %cst_90 : f32 to vector<8x512xf32>
    %180 = arith.select %178, %176, %179 : vector<8x512xi1>, vector<8x512xf32>
    %181 = arith.truncf %180 : vector<8x512xf32> to vector<8x512xbf16>
    %182 = tpu.concatenate %175, %181 in 0 : vector<8x512xbf16>, vector<8x512xbf16> -> vector<16x512xbf16>
    %c48_91 = arith.constant 48 : index
    %c0_92 = arith.constant 0 : index
    %183 = vector.load %arg6[%c48_91, %c0_92] : memref<72x512xbf16, #tpu.memory_space<vmem>>, vector<16x512xbf16>
    tpu.vector_store %arg6[%c48_91, %c0_92], %182 {strides = array<i32>} : memref<72x512xbf16, #tpu.memory_space<vmem>>, vector<16x512xbf16>,
    %c495_i32_93 = arith.constant 495 : i32
    %184 = tpu.dynamic_rotate %126 by %c495_i32_93 dim 1 : vector<8x512xf32>, i32 -> vector<8x512xf32>
    %cst_94 = arith.constant 0.000000e+00 : f32
    %185 = vector.shape_cast %48 : vector<1x512xi1> to vector<1x512xi1>
    %186 = vector.broadcast %185 : vector<1x512xi1> to vector<8x512xi1>
    %187 = vector.broadcast %cst_94 : f32 to vector<8x512xf32>
    %188 = arith.select %186, %184, %187 : vector<8x512xi1>, vector<8x512xf32>
    %189 = arith.truncf %188 : vector<8x512xf32> to vector<8x512xbf16>
    %c64_95 = arith.constant 64 : index
    %c0_96 = arith.constant 0 : index
    %190 = vector.load %arg6[%c64_95, %c0_96] : memref<72x512xbf16, #tpu.memory_space<vmem>>, vector<8x512xbf16>
    tpu.vector_store %arg6[%c64_95, %c0_96], %189 {strides = array<i32>} : memref<72x512xbf16, #tpu.memory_space<vmem>>, vector<8x512xbf16>,
    %c0_97 = arith.constant 0 : index
    %c0_98 = arith.constant 0 : index
    %191 = vector.load %arg6[%c0_97, %c0_98] : memref<72x512xbf16, #tpu.memory_space<vmem>>, vector<72x512xbf16>
    %cst_99 = arith.constant dense<0.000000e+00> : vector<8x512xf32>
    %192 = tpu.matmul %128, %191, %cst_99 {dimension_numbers = #tpu.dot_dimension_numbers<[1], [0], [0], [1], [0, 0, 1, 1], [], []>} : vector<8x72xbf16>, vector<72x512xbf16>, vector<8x512xf32> -> vector<8x512xf32>
    %193 = arith.addf %192, %4 : vector<8x512xf32>
    %194 = vector.extract_strided_slice %193 {offsets = [0, 0], sizes = [8, 256], strides = [1, 1]} : vector<8x512xf32> to vector<8x256xf32>
    %c0_100 = arith.constant 0 : index
    %c0_101 = arith.constant 0 : index
    %c0_102 = arith.constant 0 : index
    %195 = vector.load %arg5[%c0_100, %c0_101, %c0_102] : memref<2x8x256xf32, #tpu.memory_space<vmem>>, vector<1x8x256xf32>
    %196 = vector.shape_cast %195 : vector<1x8x256xf32> to vector<8x256xf32>
    %197 = vector.shape_cast %194 : vector<8x256xf32> to vector<1x8x256xf32>
    tpu.vector_store %arg5[%c0_100, %c0_101, %c0_102], %197 {strides = array<i32>} : memref<2x8x256xf32, #tpu.memory_space<vmem>>, vector<1x8x256xf32>,
    %198 = vector.extract_strided_slice %193 {offsets = [0, 256], sizes = [8, 256], strides = [1, 1]} : vector<8x512xf32> to vector<8x256xf32>
    %c1_103 = arith.constant 1 : index
    %c0_104 = arith.constant 0 : index
    %c0_105 = arith.constant 0 : index
    %199 = vector.load %arg5[%c1_103, %c0_104, %c0_105] : memref<2x8x256xf32, #tpu.memory_space<vmem>>, vector<1x8x256xf32>
    %200 = vector.shape_cast %199 : vector<1x8x256xf32> to vector<8x256xf32>
    %201 = vector.shape_cast %198 : vector<8x256xf32> to vector<1x8x256xf32>
    tpu.vector_store %arg5[%c1_103, %c0_104, %c0_105], %201 {strides = array<i32>} : memref<2x8x256xf32, #tpu.memory_space<vmem>>, vector<1x8x256xf32>,
    return
  }
  func.func @transform_0(%arg0: i32) -> (i32, i32, i32) {
    %c0_i32 = arith.constant 0 : i32
    %c0_i32_0 = arith.constant 0 : i32
    %c0_i32_1 = arith.constant 0 : i32
    return %arg0, %c0_i32, %c0_i32_0 : i32, i32, i32
  }
  func.func @transform_1(%arg0: i32) -> (i32, i32, i32) {
    %c0_i32 = arith.constant 0 : i32
    %c0_i32_0 = arith.constant 0 : i32
    %c0_i32_1 = arith.constant 0 : i32
    %c0_i32_2 = arith.constant 0 : i32
    return %c0_i32, %c0_i32_0, %c0_i32_1 : i32, i32, i32
  }
  func.func @transform_2(%arg0: i32) -> (i32, i32, i32) {
    %c0_i32 = arith.constant 0 : i32
    %c0_i32_0 = arith.constant 0 : i32
    %c0_i32_1 = arith.constant 0 : i32
    %c0_i32_2 = arith.constant 0 : i32
    return %c0_i32, %c0_i32_0, %c0_i32_1 : i32, i32, i32
  }
  func.func @transform_3(%arg0: i32) -> (i32, i32, i32) {
    %c0_i32 = arith.constant 0 : i32
    %c0_i32_0 = arith.constant 0 : i32
    %c0_i32_1 = arith.constant 0 : i32
    %c0_i32_2 = arith.constant 0 : i32
    return %c0_i32, %c0_i32_0, %c0_i32_1 : i32, i32, i32
  }
  func.func @transform_4(%arg0: i32) -> (i32, i32, i32) {
    %c0_i32 = arith.constant 0 : i32
    %c0_i32_0 = arith.constant 0 : i32
    %c0_i32_1 = arith.constant 0 : i32
    return %arg0, %c0_i32, %c0_i32_0 : i32, i32, i32
  }
}

</mosaic_0001>

<llo_original>
// kernel: residual_block_nchw.1
$region0: #{residual_block_nchw.1}
  #allocation0 [shape = 'u32[]', space=smem, size = 0x4, offset = 0x4, fixed_abs, tag = 'smem constant byte address 0x4 - core index']
  #allocation1 [shape = 'u32[72,128]{1,0:T(1,128)}', space=vmem, size = 0x9000, scoped, tag = 'internal scratch']
  #allocation2 [shape = 'bf16[72,512]{1,0:T(8,128)(2,1)}', space=vmem, size = 0x12000, scoped, tag = 'scratch operand']
  %s0 = inlined_call_operand.vmem [shape: f32[4,8,256], index: 0, kind: input, shape index: {}]
  %s1 = inlined_call_operand.vmem [shape: bf16[2,8,72], index: 1, kind: input, shape index: {}]
  %s2 = inlined_call_operand.vmem [shape: f32[4,8,1], index: 2, kind: input, shape index: {}]
  %s3 = inlined_call_operand.vmem [shape: f32[9,1,512], index: 3, kind: input, shape index: {}]
  %s4 = inlined_call_operand.vmem [shape: f32[4,8,256], index: 4, kind: output, shape index: {}]
  %s5 = sld [smem:[#allocation0]]
  $region49: #{residual_block_nchw.1} parent=0
    _
  %s7 = ssub.s32 1, %s5
  %s8 = scalar_select 0, %s7, %s5
  loop: start=0, step=1, limit=4
  $region2: #{residual_block_nchw.1} parent=0 // loop_pre_header
    _
  $region3: #{residual_block_nchw.1} parent=0 // loop_header
    %s10 = sphi 0, %s14
    %p11 = scmp.ge.s32.totalorder %s10, 4
    %s20 = sphi 0, %s22
    %s23 = sphi 0, %s20
    %s24 = sphi 0, %s23
    %s40 = sphi 0, %s24
    %s44 = sphi 0, %s44
    %s46 = sphi 0, %s44
    %s47 = sphi 0, %s46
    %s61 = sphi 0, %s47
    %s65 = sphi 0, %s65
    %s67 = sphi 0, %s65
    %s68 = sphi 0, %s67
    %s82 = sphi 0, %s68
    %s86 = sphi 0, %s86
    %s88 = sphi 0, %s86
    %s89 = sphi 0, %s88
    %s103 = sphi 0, %s89
    %s109 = sphi 0, %s111
    %s112 = sphi 0, %s109
    %s113 = sphi 0, %s112
    %s129 = sphi 0, %s113
  $region4: #{residual_block_nchw.1} parent=0 // loop_header_branch
    %13 = sbr.rel (%p11) target = $region8
  $region5: #{residual_block_nchw.1} parent=0 // loop_body
    %s15 = ssub.s32 %s10, 1
    %s16 = ssub.s32 %s10, 2
    %s17 = sadd.s32 %s10, 1
    %s18 = ssub.s32 %s10, %s17
    %p19 = scmp.eq.s32.totalorder %s18, 0
    %s21 = sadd.s32 %s20, 1
    %s22 = scalar_select %p19, %s20, %s21
    %p25 = pneg %p19
    %p26 = scmp.eq.s32.totalorder %s10, 1
    %p27 = por %p25, %p26
    %p28 = scmp.ne.s32.totalorder %s20, %s23
    %p29 = scmp.eq.s32.totalorder %s10, 0
    %p30 = por %p28, %p29
    %p31 = scmp.ne.s32.totalorder %s20, %s23
    %p32 = scmp.eq.s32.totalorder %s15, 1
    %p33 = por %p31, %p32
    %p34 = scmp.ne.s32.totalorder %s23, %s24
    %p35 = scmp.eq.s32.totalorder %s15, 0
    %p36 = por %p34, %p35
    %p37 = scmp.ne.s32.totalorder %s23, %s24
    %p38 = scmp.eq.s32.totalorder %s16, 1
    %p39 = por %p37, %p38
    %p41 = scmp.ne.s32.totalorder %s24, %s40
    %p42 = scmp.eq.s32.totalorder %s16, 0
    %p43 = por %p41, %p42
    %s45 = sadd.s32 %s44, 1
    %p48 = scmp.eq.s32.totalorder %s10, 1
    %p49 = scmp.ne.s32.totalorder %s44, %s46
    %p50 = scmp.eq.s32.totalorder %s10, 0
    %p51 = por %p49, %p50
    %p52 = scmp.ne.s32.totalorder %s44, %s46
    %p53 = scmp.eq.s32.totalorder %s15, 1
    %p54 = por %p52, %p53
    %p55 = scmp.ne.s32.totalorder %s46, %s47
    %p56 = scmp.eq.s32.totalorder %s15, 0
    %p57 = por %p55, %p56
    %p58 = scmp.ne.s32.totalorder %s46, %s47
    %p59 = scmp.eq.s32.totalorder %s16, 1
    %p60 = por %p58, %p59
    %p62 = scmp.ne.s32.totalorder %s47, %s61
    %p63 = scmp.eq.s32.totalorder %s16, 0
    %p64 = por %p62, %p63
    %s66 = sadd.s32 %s65, 1
    %p69 = scmp.eq.s32.totalorder %s10, 1
    %p70 = scmp.ne.s32.totalorder %s65, %s67
    %p71 = scmp.eq.s32.totalorder %s10, 0
    %p72 = por %p70, %p71
    %p73 = scmp.ne.s32.totalorder %s65, %s67
    %p74 = scmp.eq.s32.totalorder %s15, 1
    %p75 = por %p73, %p74
    %p76 = scmp.ne.s32.totalorder %s67, %s68
    %p77 = scmp.eq.s32.totalorder %s15, 0
    %p78 = por %p76, %p77
    %p79 = scmp.ne.s32.totalorder %s67, %s68
    %p80 = scmp.eq.s32.totalorder %s16, 1
    %p81 = por %p79, %p80
    %p83 = scmp.ne.s32.totalorder %s68, %s82
    %p84 = scmp.eq.s32.totalorder %s16, 0
    %p85 = por %p83, %p84
    %s87 = sadd.s32 %s86, 1
    %p90 = scmp.eq.s32.totalorder %s10, 1
    %p91 = scmp.ne.s32.totalorder %s86, %s88
    %p92 = scmp.eq.s32.totalorder %s10, 0
    %p93 = por %p91, %p92
    %p94 = scmp.ne.s32.totalorder %s86, %s88
    %p95 = scmp.eq.s32.totalorder %s15, 1
    %p96 = por %p94, %p95
    %p97 = scmp.ne.s32.totalorder %s88, %s89
    %p98 = scmp.eq.s32.totalorder %s15, 0
    %p99 = por %p97, %p98
    %p100 = scmp.ne.s32.totalorder %s88, %s89
    %p101 = scmp.eq.s32.totalorder %s16, 1
    %p102 = por %p100, %p101
    %p104 = scmp.ne.s32.totalorder %s89, %s103
    %p105 = scmp.eq.s32.totalorder %s16, 0
    %p106 = por %p104, %p105
    %s107 = ssub.s32 %s10, %s17
    %p108 = scmp.eq.s32.totalorder %s107, 0
    %s110 = sadd.s32 %s109, 1
    %s111 = scalar_select %p108, %s109, %s110
    %p114 = pneg %p108
    %p115 = scmp.eq.s32.totalorder %s10, 1
    %p116 = por %p114, %p115
    %p117 = scmp.ne.s32.totalorder %s109, %s112
    %p118 = scmp.eq.s32.totalorder %s10, 0
    %p119 = por %p117, %p118
    %p120 = scmp.ne.s32.totalorder %s109, %s112
    %p121 = scmp.eq.s32.totalorder %s15, 1
    %p122 = por %p120, %p121
    %p123 = scmp.ne.s32.totalorder %s112, %s113
    %p124 = scmp.eq.s32.totalorder %s15, 0
    %p125 = por %p123, %p124
    %p126 = scmp.ne.s32.totalorder %s112, %s113
    %p127 = scmp.eq.s32.totalorder %s16, 1
    %p128 = por %p126, %p127
    %p130 = scmp.ne.s32.totalorder %s113, %s129
    %p131 = scmp.eq.s32.totalorder %s16, 0
    %p132 = por %p130, %p131
    %p133 = scmp.le.s32.totalorder 1, %s10
    %p134 = scmp.lt.s32.totalorder %s10, 3
    %p135 = pnand %p133, %p134
    %p136 = pneg %p135
    // Predicated region
    $region9: #{residual_block_nchw.1} parent=5 // pred_check
      _
    $region10: #{residual_block_nchw.1} parent=5 // pred_check_branch
      %138 = sbr.rel (%p135) target = $region12
    $region11: #{residual_block_nchw.1} parent=5 // pred_region
      %s139 = ssub.s32 %s10, 1
      // Predicated region
      $region13: #{residual_block_nchw.1} parent=11 // pred_check
        %p140 = pneg %p57
      $region14: #{residual_block_nchw.1} parent=11 // pred_check_branch
        %142 = sbr.rel (%p140) target = $region16
      $region15: #{residual_block_nchw.1} parent=11 // pred_region
        _
      $region16: #{residual_block_nchw.1} parent=11 // pred_fallthru
        _
      // Predicated region
      $region17: #{residual_block_nchw.1} parent=11 // pred_check
        %p143 = pneg %p78
      $region18: #{residual_block_nchw.1} parent=11 // pred_check_branch
        %145 = sbr.rel (%p143) target = $region20
      $region19: #{residual_block_nchw.1} parent=11 // pred_region
        _
      $region20: #{residual_block_nchw.1} parent=11 // pred_fallthru
        _
      // Predicated region
      $region21: #{residual_block_nchw.1} parent=11 // pred_check
        %p146 = pneg %p99
      $region22: #{residual_block_nchw.1} parent=11 // pred_check_branch
        %148 = sbr.rel (%p146) target = $region24
      $region23: #{residual_block_nchw.1} parent=11 // pred_region
        _
      $region24: #{residual_block_nchw.1} parent=11 // pred_fallthru
        _
    $region12: #{residual_block_nchw.1} parent=5 // pred_fallthru
      _
    %p149 = scmp.lt.s32.totalorder %s10, 2
    // Predicated region
    $region25: #{residual_block_nchw.1} parent=5 // pred_check
      %p150 = pneg %p149
    $region26: #{residual_block_nchw.1} parent=5 // pred_check_branch
      %152 = sbr.rel (%p150) target = $region28
    $region27: #{residual_block_nchw.1} parent=5 // pred_region
      // Predicated region
      $region29: #{residual_block_nchw.1} parent=27 // pred_check
        %p153 = pneg %p30
      $region30: #{residual_block_nchw.1} parent=27 // pred_check_branch
        %155 = sbr.rel (%p153) target = $region32
      $region31: #{residual_block_nchw.1} parent=27 // pred_region
        %s156 = smul.u32 2, %s10
        %p157 = scmp.lt.s32.totalorder %s156, 3
        %s158 = scalar_select %p157, %s156, 3
        %s159 = smul.addr %s158, 2
        %s160 = smul.addr %s159, 8
        %s161 = scalar_lea.vmem %s0, %s160
        %s162 = smul.u32 2, %s10
      $region32: #{residual_block_nchw.1} parent=27 // pred_fallthru
        _
    $region28: #{residual_block_nchw.1} parent=5 // pred_fallthru
      _
    %p163 = scmp.le.s32.totalorder 1, %s10
    %p164 = scmp.lt.s32.totalorder %s10, 3
    %p165 = pnand %p163, %p164
    %p166 = pneg %p165
    // Predicated region
    $region33: #{residual_block_nchw.1} parent=5 // pred_check
      _
    $region34: #{residual_block_nchw.1} parent=5 // pred_check_branch
      %168 = sbr.rel (%p165) target = $region36
    $region35: #{residual_block_nchw.1} parent=5 // pred_region
      %s169 = ssub.s32 %s10, 1
      %s170 = smul.u32 2, %s15
      %p171 = scmp.lt.s32.totalorder %s170, 3
      %s172 = scalar_select %p171, %s170, 3
      %s173 = smul.addr %s172, 2
      %s174 = smul.addr %s173, 8
      %s175 = scalar_lea.vmem %s0, %s174
      %p176 = pneg %p36
      %p177 = pneg %p33
      %p178 = pneg %p57
      %p179 = pneg %p54
      %p180 = pneg %p78
      %p181 = pneg %p75
      %p182 = pneg %p99
      %p183 = pneg %p96
      %p184 = pneg %p125
      %p185 = pneg %p122
      %s186 = smul.u32 2, %s15
      %p187 = scmp.lt.s32.totalorder %s186, 3
      %s188 = scalar_select %p187, %s186, 3
      %s189 = smul.addr %s188, 2
      %s190 = smul.addr %s189, 8
      %s191 = scalar_lea.vmem %s4, %s190
      %s192 = smul.u32 2, %s15
      %p193 = scmp.lt.s32.totalorder %s192, 3
      %s194 = scalar_select %p193, %s192, 3
      %s195 = smul.addr %s194, 2
      %s196 = smul.addr %s195, 8
      %s197 = scalar_lea.vmem %s0, %s196
      %s198 = smul.u32 2, %s15
      %s199 = smul.u32 2, %s15
      %p200 = scmp.lt.s32.totalorder %s199, 3
      %s201 = scalar_select %p200, %s199, 3
      %s202 = smul.addr %s201, 2
      %s203 = smul.addr %s202, 8
      %s204 = scalar_lea.vmem %s4, %s203
      %s205 = smul.u32 2, %s15
      %v207 = vld [vmem:[%s197] sm:$0xff]
      %v208 = vld [vmem:[%s197 + $0x8] sm:$0xff]
      %s209 = scalar_lea.vmem %s197, 16
      %v210 = vld [vmem:[%s209] sm:$0xff]
      %v211 = vld [vmem:[%s209 + $0x8] sm:$0xff]
      %v212 = vld [vmem:[%s2] sm:$0xff]
      %s213 = scalar_lea.vmem %s2, 8
      %v214 = vld [vmem:[%s213] sm:$0xff]
      %s215 = scalar_lea.vmem %s2, 16
      %v216 = vld [vmem:[%s215] sm:$0xff]
      %s217 = scalar_lea.vmem %s2, 24
      %v218 = vld [vmem:[%s217] sm:$0xff]
      %v219 = vld [vmem:[%s3] sm:$0xf]
      %vm220 = vcmp.ne.f32.partialorder %v219, 0.0
      %s221 = scalar_lea.vmem %s3, 4
      %v222 = vld [vmem:[%s221] sm:$0xf]
      %vm223 = vcmp.ne.f32.partialorder %v222, 0.0
      %s224 = scalar_lea.vmem %s3, 8
      %v225 = vld [vmem:[%s224] sm:$0xf]
      %vm226 = vcmp.ne.f32.partialorder %v225, 0.0
      %s227 = scalar_lea.vmem %s3, 12
      %v228 = vld [vmem:[%s227] sm:$0xf]
      %vm229 = vcmp.ne.f32.partialorder %v228, 0.0
      %s230 = scalar_lea.vmem %s3, 16
      %v231 = vld [vmem:[%s230] sm:$0xf]
      %vm232 = vcmp.ne.f32.partialorder %v231, 0.0
      %s233 = scalar_lea.vmem %s3, 20
      %v234 = vld [vmem:[%s233] sm:$0xf]
      %vm235 = vcmp.ne.f32.partialorder %v234, 0.0
      %s236 = scalar_lea.vmem %s3, 24
      %v237 = vld [vmem:[%s236] sm:$0xf]
      %vm238 = vcmp.ne.f32.partialorder %v237, 0.0
      %s239 = scalar_lea.vmem %s3, 28
      %v240 = vld [vmem:[%s239] sm:$0xf]
      %vm241 = vcmp.ne.f32.partialorder %v240, 0.0
      %s242 = scalar_lea.vmem %s3, 32
      %v243 = vld [vmem:[%s242] sm:$0xf]
      %vm244 = vcmp.ne.f32.partialorder %v243, 0.0
      %246 = vset.pattern.permute.xlu0 0
      %247 = vperm.xlu0 %246, %v212
      %v248 = vpop.permute.xlu0 %247
      %v250 = vmul.f32 %v207, %v248
      %v251 = vmul.f32 %v208, %v248
      %v252 = vmul.f32 %v210, %v248
      %v253 = vmul.f32 %v211, %v248
      %255 = vset.pattern.permute.xlu0 0
      %256 = vperm.xlu0 %255, %v214
      %v257 = vpop.permute.xlu0 %256
      %v259 = vadd.f32 %v250, %v257
      %v260 = vadd.f32 %v251, %v257
      %v261 = vadd.f32 %v252, %v257
      %v262 = vadd.f32 %v253, %v257
      %v263 = vmax.f32 %v259, 0.0
      %v264 = vmax.f32 %v260, 0.0
      %v265 = vmax.f32 %v261, 0.0
      %v266 = vmax.f32 %v262, 0.0
      %v267 = vld [vmem:[%s1] sm:$0xf]
      %268 = vrot.lane.b32.xlu0 %v263, 17
      %v269 = vpop.permute.xlu0 %268
      %270 = vrot.lane.b32.xlu0 %v264, 17
      %v271 = vpop.permute.xlu0 %270
      %272 = vrot.lane.b32.xlu0 %v265, 17
      %v273 = vpop.permute.xlu0 %272
      %274 = vrot.lane.b32.xlu0 %v266, 17
      %v275 = vpop.permute.xlu0 %274
      %v276 = vlaneseq
      %v277 = vand.u32 %v276, 127
      %vm278 = vcmp.lt.s32.totalorder %v277, 17
      %v279 = vsel %vm278, %v273, %v275
      %v280 = vsel %vm278, %v271, %v273
      %v281 = vsel %vm278, %v269, %v271
      %v282 = vsel %vm278, %v275, %v269
      %v283 = vsel %vm220, 1, 0
      %v284 = vperm.slane %v283, 0
      %v285 = vperm.slane %v283, 1
      %v286 = vperm.slane %v283, 2
      %v287 = vperm.slane %v283, 3
      %vm288 = vcmp.eq.s32.totalorder %v284, 1
      %vm289 = vcmp.eq.s32.totalorder %v285, 1
      %vm290 = vcmp.eq.s32.totalorder %v286, 1
      %vm291 = vcmp.eq.s32.totalorder %v287, 1
      %v292 = vsel %vm288, %v282, 0.0
      %v293 = vsel %vm289, %v281, 0.0
      %v294 = vsel %vm290, %v280, 0.0
      %v295 = vsel %vm291, %v279, 0.0
      %v296 = vpack.c.bf16 %v293, %v292
      %v297 = vpack.c.bf16 %v295, %v294
      %298 = vrot.lane.b32.xlu0 %v263, 16
      %v299 = vpop.permute.xlu0 %298
      %300 = vrot.lane.b32.xlu0 %v264, 16
      %v301 = vpop.permute.xlu0 %300
      %302 = vrot.lane.b32.xlu0 %v265, 16
      %v303 = vpop.permute.xlu0 %302
      %304 = vrot.lane.b32.xlu0 %v266, 16
      %v305 = vpop.permute.xlu0 %304
      %vm306 = vcmp.lt.s32.totalorder %v277, 16
      %v307 = vsel %vm306, %v303, %v305
      %v308 = vsel %vm306, %v301, %v303
      %v309 = vsel %vm306, %v299, %v301
      %v310 = vsel %vm306, %v305, %v299
      %v311 = vsel %vm223, 1, 0
      %v312 = vperm.slane %v311, 0
      %v313 = vperm.slane %v311, 1
      %v314 = vperm.slane %v311, 2
      %v315 = vperm.slane %v311, 3
      %vm316 = vcmp.eq.s32.totalorder %v312, 1
      %vm317 = vcmp.eq.s32.totalorder %v313, 1
      %vm318 = vcmp.eq.s32.totalorder %v314, 1
      %vm319 = vcmp.eq.s32.totalorder %v315, 1
      %v320 = vsel %vm316, %v310, 0.0
      %v321 = vsel %vm317, %v309, 0.0
      %v322 = vsel %vm318, %v308, 0.0
      %v323 = vsel %vm319, %v307, 0.0
      %v324 = vpack.c.bf16 %v321, %v320
      %v325 = vpack.c.bf16 %v323, %v322
      %v328 = vunpack.c.l.b16 %v296
      %v329 = vunpack.c.h.b16 %v296
      %v330 = vunpack.c.l.b16 %v297
      %v331 = vunpack.c.h.b16 %v297
      %v332 = vpack.c.b16 %v328, %v328
      %v333 = vpack.c.b16 %v329, %v329
      %v334 = vpack.c.b16 %v330, %v330
      %v335 = vpack.c.b16 %v331, %v331
      %v338 = vunpack.c.l.b16 %v324
      %v339 = vunpack.c.h.b16 %v324
      %v340 = vunpack.c.l.b16 %v325
      %v341 = vunpack.c.h.b16 %v325
      %v342 = vpack.c.b16 %v338, %v338
      %v343 = vpack.c.b16 %v339, %v339
      %v344 = vpack.c.b16 %v340, %v340
      %v345 = vpack.c.b16 %v341, %v341
      %vm346 = vcmask 1043456
      %v349 = vsel %vm346, %v332, %v342
      %v352 = vsel %vm346, %v333, %v343
      %v355 = vsel %vm346, %v334, %v344
      %v358 = vsel %vm346, %v335, %v345
      %v363 = vunpack.c.l.b16 %v349
      %v364 = vunpack.c.l.b16 %v352
      %v365 = vunpack.c.l.b16 %v355
      %v366 = vunpack.c.l.b16 %v358
      %v367 = vunpack.c.h.b16 %v349
      %v368 = vunpack.c.h.b16 %v352
      %v369 = vunpack.c.h.b16 %v355
      %v370 = vunpack.c.h.b16 %v358
      %v371 = vpack.c.b16 %v364, %v363
      %v372 = vpack.c.b16 %v366, %v365
      %v373 = vpack.c.b16 %v368, %v367
      %v374 = vpack.c.b16 %v370, %v369
      %379 = vst [vmem:[#allocation2] sm:$0xff] %v371
      %380 = vst [vmem:[#allocation2 + $0x8] sm:$0xff] %v372
      %381 = vst [vmem:[#allocation2 + $0x10] sm:$0xff] %v373
      %382 = vst [vmem:[#allocation2 + $0x18] sm:$0xff] %v374
      %383 = vrot.lane.b32.xlu0 %v263, 15
      %v384 = vpop.permute.xlu0 %383
      %385 = vrot.lane.b32.xlu0 %v264, 15
      %v386 = vpop.permute.xlu0 %385
      %387 = vrot.lane.b32.xlu0 %v265, 15
      %v388 = vpop.permute.xlu0 %387
      %389 = vrot.lane.b32.xlu0 %v266, 15
      %v390 = vpop.permute.xlu0 %389
      %vm391 = vcmp.lt.s32.totalorder %v277, 15
      %v392 = vsel %vm391, %v388, %v390
      %v393 = vsel %vm391, %v386, %v388
      %v394 = vsel %vm391, %v384, %v386
      %v395 = vsel %vm391, %v390, %v384
      %v396 = vsel %vm226, 1, 0
      %v397 = vperm.slane %v396, 0
      %v398 = vperm.slane %v396, 1
      %v399 = vperm.slane %v396, 2
      %v400 = vperm.slane %v396, 3
      %vm401 = vcmp.eq.s32.totalorder %v397, 1
      %vm402 = vcmp.eq.s32.totalorder %v398, 1
      %vm403 = vcmp.eq.s32.totalorder %v399, 1
      %vm404 = vcmp.eq.s32.totalorder %v400, 1
      %v405 = vsel %vm401, %v395, 0.0
      %v406 = vsel %vm402, %v394, 0.0
      %v407 = vsel %vm403, %v393, 0.0
      %v408 = vsel %vm404, %v392, 0.0
      %v409 = vpack.c.bf16 %v406, %v405
      %v410 = vpack.c.bf16 %v408, %v407
      %411 = vrot.lane.b32.xlu0 %v263, 1
      %v412 = vpop.permute.xlu0 %411
      %413 = vrot.lane.b32.xlu0 %v264, 1
      %v414 = vpop.permute.xlu0 %413
      %415 = vrot.lane.b32.xlu0 %v265, 1
      %v416 = vpop.permute.xlu0 %415
      %417 = vrot.lane.b32.xlu0 %v266, 1
      %v418 = vpop.permute.xlu0 %417
      %vm419 = vcmp.lt.s32.totalorder %v277, 1
      %v420 = vsel %vm419, %v416, %v418
      %v421 = vsel %vm419, %v414, %v416
      %v422 = vsel %vm419, %v412, %v414
      %v423 = vsel %vm419, %v418, %v412
      %v424 = vsel %vm229, 1, 0
      %v425 = vperm.slane %v424, 0
      %v426 = vperm.slane %v424, 1
      %v427 = vperm.slane %v424, 2
      %v428 = vperm.slane %v424, 3
      %vm429 = vcmp.eq.s32.totalorder %v425, 1
      %vm430 = vcmp.eq.s32.totalorder %v426, 1
      %vm431 = vcmp.eq.s32.totalorder %v427, 1
      %vm432 = vcmp.eq.s32.totalorder %v428, 1
      %v433 = vsel %vm429, %v423, 0.0
      %v434 = vsel %vm430, %v422, 0.0
      %v435 = vsel %vm431, %v421, 0.0
      %v436 = vsel %vm432, %v420, 0.0
      %v437 = vpack.c.bf16 %v434, %v433
      %v438 = vpack.c.bf16 %v436, %v435
      %v441 = vunpack.c.l.b16 %v409
      %v442 = vunpack.c.h.b16 %v409
      %v443 = vunpack.c.l.b16 %v410
      %v444 = vunpack.c.h.b16 %v410
      %v445 = vpack.c.b16 %v441, %v441
      %v446 = vpack.c.b16 %v442, %v442
      %v447 = vpack.c.b16 %v443, %v443
      %v448 = vpack.c.b16 %v444, %v444
      %v451 = vunpack.c.l.b16 %v437
      %v452 = vunpack.c.h.b16 %v437
      %v453 = vunpack.c.l.b16 %v438
      %v454 = vunpack.c.h.b16 %v438
      %v455 = vpack.c.b16 %v451, %v451
      %v456 = vpack.c.b16 %v452, %v452
      %v457 = vpack.c.b16 %v453, %v453
      %v458 = vpack.c.b16 %v454, %v454
      %v461 = vsel %vm346, %v445, %v455
      %v464 = vsel %vm346, %v446, %v456
      %v467 = vsel %vm346, %v447, %v457
      %v470 = vsel %vm346, %v448, %v458
      %v475 = vunpack.c.l.b16 %v461
      %v476 = vunpack.c.l.b16 %v464
      %v477 = vunpack.c.l.b16 %v467
      %v478 = vunpack.c.l.b16 %v470
      %v479 = vunpack.c.h.b16 %v461
      %v480 = vunpack.c.h.b16 %v464
      %v481 = vunpack.c.h.b16 %v467
      %v482 = vunpack.c.h.b16 %v470
      %v483 = vpack.c.b16 %v476, %v475
      %v484 = vpack.c.b16 %v478, %v477
      %v485 = vpack.c.b16 %v480, %v479
      %v486 = vpack.c.b16 %v482, %v481
      %491 = vst [vmem:[#allocation2 + $0x20] sm:$0xff] %v483
      %492 = vst [vmem:[#allocation2 + $0x28] sm:$0xff] %v484
      %493 = vst [vmem:[#allocation2 + $0x30] sm:$0xff] %v485
      %494 = vst [vmem:[#allocation2 + $0x38] sm:$0xff] %v486
      %v495 = vsel %vm232, 1, 0
      %v496 = vperm.slane %v495, 0
      %v497 = vperm.slane %v495, 1
      %v498 = vperm.slane %v495, 2
      %v499 = vperm.slane %v495, 3
      %vm500 = vcmp.eq.s32.totalorder %v496, 1
      %vm501 = vcmp.eq.s32.totalorder %v497, 1
      %vm502 = vcmp.eq.s32.totalorder %v498, 1
      %vm503 = vcmp.eq.s32.totalorder %v499, 1
      %v504 = vsel %vm500, %v263, 0.0
      %v505 = vsel %vm501, %v264, 0.0
      %v506 = vsel %vm502, %v265, 0.0
      %v507 = vsel %vm503, %v266, 0.0
      %v508 = vpack.c.bf16 %v505, %v504
      %v509 = vpack.c.bf16 %v507, %v506
      %510 = vrot.lane.b32.xlu0 %v263, 127
      %v511 = vpop.permute.xlu0 %510
      %512 = vrot.lane.b32.xlu0 %v264, 127
      %v513 = vpop.permute.xlu0 %512
      %514 = vrot.lane.b32.xlu0 %v265, 127
      %v515 = vpop.permute.xlu0 %514
      %516 = vrot.lane.b32.xlu0 %v266, 127
      %v517 = vpop.permute.xlu0 %516
      %vm518 = vcmp.lt.s32.totalorder %v277, 127
      %v519 = vsel %vm518, %v515, %v517
      %v520 = vsel %vm518, %v513, %v515
      %v521 = vsel %vm518, %v511, %v513
      %v522 = vsel %vm518, %v517, %v511
      %v523 = vsel %vm235, 1, 0
      %v524 = vperm.slane %v523, 0
      %v525 = vperm.slane %v523, 1
      %v526 = vperm.slane %v523, 2
      %v527 = vperm.slane %v523, 3
      %vm528 = vcmp.eq.s32.totalorder %v524, 1
      %vm529 = vcmp.eq.s32.totalorder %v525, 1
      %vm530 = vcmp.eq.s32.totalorder %v526, 1
      %vm531 = vcmp.eq.s32.totalorder %v527, 1
      %v532 = vsel %vm528, %v521, 0.0
      %v533 = vsel %vm529, %v520, 0.0
      %v534 = vsel %vm530, %v519, 0.0
      %v535 = vsel %vm531, %v522, 0.0
      %v536 = vpack.c.bf16 %v533, %v532
      %v537 = vpack.c.bf16 %v535, %v534
      %v540 = vunpack.c.l.b16 %v508
      %v541 = vunpack.c.h.b16 %v508
      %v542 = vunpack.c.l.b16 %v509
      %v543 = vunpack.c.h.b16 %v509
      %v544 = vpack.c.b16 %v540, %v540
      %v545 = vpack.c.b16 %v541, %v541
      %v546 = vpack.c.b16 %v542, %v542
      %v547 = vpack.c.b16 %v543, %v543
      %v550 = vunpack.c.l.b16 %v536
      %v551 = vunpack.c.h.b16 %v536
      %v552 = vunpack.c.l.b16 %v537
      %v553 = vunpack.c.h.b16 %v537
      %v554 = vpack.c.b16 %v550, %v550
      %v555 = vpack.c.b16 %v551, %v551
      %v556 = vpack.c.b16 %v552, %v552
      %v557 = vpack.c.b16 %v553, %v553
      %v560 = vsel %vm346, %v544, %v554
      %v563 = vsel %vm346, %v545, %v555
      %v566 = vsel %vm346, %v546, %v556
      %v569 = vsel %vm346, %v547, %v557
      %v574 = vunpack.c.l.b16 %v560
      %v575 = vunpack.c.l.b16 %v563
      %v576 = vunpack.c.l.b16 %v566
      %v577 = vunpack.c.l.b16 %v569
      %v578 = vunpack.c.h.b16 %v560
      %v579 = vunpack.c.h.b16 %v563
      %v580 = vunpack.c.h.b16 %v566
      %v581 = vunpack.c.h.b16 %v569
      %v582 = vpack.c.b16 %v575, %v574
      %v583 = vpack.c.b16 %v577, %v576
      %v584 = vpack.c.b16 %v579, %v578
      %v585 = vpack.c.b16 %v581, %v580
      %590 = vst [vmem:[#allocation2 + $0x40] sm:$0xff] %v582
      %591 = vst [vmem:[#allocation2 + $0x48] sm:$0xff] %v583
      %592 = vst [vmem:[#allocation2 + $0x50] sm:$0xff] %v584
      %593 = vst [vmem:[#allocation2 + $0x58] sm:$0xff] %v585
      %594 = vrot.lane.b32.xlu0 %v263, 113
      %v595 = vpop.permute.xlu0 %594
      %596 = vrot.lane.b32.xlu0 %v264, 113
      %v597 = vpop.permute.xlu0 %596
      %598 = vrot.lane.b32.xlu0 %v265, 113
      %v599 = vpop.permute.xlu0 %598
      %600 = vrot.lane.b32.xlu0 %v266, 113
      %v601 = vpop.permute.xlu0 %600
      %vm602 = vcmp.lt.s32.totalorder %v277, 113
      %v603 = vsel %vm602, %v599, %v601
      %v604 = vsel %vm602, %v597, %v599
      %v605 = vsel %vm602, %v595, %v597
      %v606 = vsel %vm602, %v601, %v595
      %v607 = vsel %vm238, 1, 0
      %v608 = vperm.slane %v607, 0
      %v609 = vperm.slane %v607, 1
      %v610 = vperm.slane %v607, 2
      %v611 = vperm.slane %v607, 3
      %vm612 = vcmp.eq.s32.totalorder %v608, 1
      %vm613 = vcmp.eq.s32.totalorder %v609, 1
      %vm614 = vcmp.eq.s32.totalorder %v610, 1
      %vm615 = vcmp.eq.s32.totalorder %v611, 1
      %v616 = vsel %vm612, %v605, 0.0
      %v617 = vsel %vm613, %v604, 0.0
      %v618 = vsel %vm614, %v603, 0.0
      %v619 = vsel %vm615, %v606, 0.0
      %v620 = vpack.c.bf16 %v617, %v616
      %v621 = vpack.c.bf16 %v619, %v618
      %622 = vrot.lane.b32.xlu0 %v263, 112
      %v623 = vpop.permute.xlu0 %622
      %624 = vrot.lane.b32.xlu0 %v264, 112
      %v625 = vpop.permute.xlu0 %624
      %626 = vrot.lane.b32.xlu0 %v265, 112
      %v627 = vpop.permute.xlu0 %626
      %628 = vrot.lane.b32.xlu0 %v266, 112
      %v629 = vpop.permute.xlu0 %628
      %vm630 = vcmp.lt.s32.totalorder %v277, 112
      %v631 = vsel %vm630, %v627, %v629
      %v632 = vsel %vm630, %v625, %v627
      %v633 = vsel %vm630, %v623, %v625
      %v634 = vsel %vm630, %v629, %v623
      %v635 = vsel %vm241, 1, 0
      %v636 = vperm.slane %v635, 0
      %v637 = vperm.slane %v635, 1
      %v638 = vperm.slane %v635, 2
      %v639 = vperm.slane %v635, 3
      %vm640 = vcmp.eq.s32.totalorder %v636, 1
      %vm641 = vcmp.eq.s32.totalorder %v637, 1
      %vm642 = vcmp.eq.s32.totalorder %v638, 1
      %vm643 = vcmp.eq.s32.totalorder %v639, 1
      %v644 = vsel %vm640, %v633, 0.0
      %v645 = vsel %vm641, %v632, 0.0
      %v646 = vsel %vm642, %v631, 0.0
      %v647 = vsel %vm643, %v634, 0.0
      %v648 = vpack.c.bf16 %v645, %v644
      %v649 = vpack.c.bf16 %v647, %v646
      %v652 = vunpack.c.l.b16 %v620
      %v653 = vunpack.c.h.b16 %v620
      %v654 = vunpack.c.l.b16 %v621
      %v655 = vunpack.c.h.b16 %v621
      %v656 = vpack.c.b16 %v652, %v652
      %v657 = vpack.c.b16 %v653, %v653
      %v658 = vpack.c.b16 %v654, %v654
      %v659 = vpack.c.b16 %v655, %v655
      %v662 = vunpack.c.l.b16 %v648
      %v663 = vunpack.c.h.b16 %v648
      %v664 = vunpack.c.l.b16 %v649
      %v665 = vunpack.c.h.b16 %v649
      %v666 = vpack.c.b16 %v662, %v662
      %v667 = vpack.c.b16 %v663, %v663
      %v668 = vpack.c.b16 %v664, %v664
      %v669 = vpack.c.b16 %v665, %v665
      %v672 = vsel %vm346, %v656, %v666
      %v675 = vsel %vm346, %v657, %v667
      %v678 = vsel %vm346, %v658, %v668
      %v681 = vsel %vm346, %v659, %v669
      %v686 = vunpack.c.l.b16 %v672
      %v687 = vunpack.c.l.b16 %v675
      %v688 = vunpack.c.l.b16 %v678
      %v689 = vunpack.c.l.b16 %v681
      %v690 = vunpack.c.h.b16 %v672
      %v691 = vunpack.c.h.b16 %v675
      %v692 = vunpack.c.h.b16 %v678
      %v693 = vunpack.c.h.b16 %v681
      %v694 = vpack.c.b16 %v687, %v686
      %v695 = vpack.c.b16 %v689, %v688
      %v696 = vpack.c.b16 %v691, %v690
      %v697 = vpack.c.b16 %v693, %v692
      %702 = vst [vmem:[#allocation2 + $0x60] sm:$0xff] %v694
      %703 = vst [vmem:[#allocation2 + $0x68] sm:$0xff] %v695
      %704 = vst [vmem:[#allocation2 + $0x70] sm:$0xff] %v696
      %705 = vst [vmem:[#allocation2 + $0x78] sm:$0xff] %v697
      %706 = vrot.lane.b32.xlu0 %v263, 111
      %v707 = vpop.permute.xlu0 %706
      %708 = vrot.lane.b32.xlu0 %v264, 111
      %v709 = vpop.permute.xlu0 %708
      %710 = vrot.lane.b32.xlu0 %v265, 111
      %v711 = vpop.permute.xlu0 %710
      %712 = vrot.lane.b32.xlu0 %v266, 111
      %v713 = vpop.permute.xlu0 %712
      %vm714 = vcmp.lt.s32.totalorder %v277, 111
      %v715 = vsel %vm714, %v711, %v713
      %v716 = vsel %vm714, %v709, %v711
      %v717 = vsel %vm714, %v707, %v709
      %v718 = vsel %vm714, %v713, %v707
      %v719 = vsel %vm244, 1, 0
      %v720 = vperm.slane %v719, 0
      %v721 = vperm.slane %v719, 1
      %v722 = vperm.slane %v719, 2
      %v723 = vperm.slane %v719, 3
      %vm724 = vcmp.eq.s32.totalorder %v720, 1
      %vm725 = vcmp.eq.s32.totalorder %v721, 1
      %vm726 = vcmp.eq.s32.totalorder %v722, 1
      %vm727 = vcmp.eq.s32.totalorder %v723, 1
      %v728 = vsel %vm724, %v717, 0.0
      %v729 = vsel %vm725, %v716, 0.0
      %v730 = vsel %vm726, %v715, 0.0
      %v731 = vsel %vm727, %v718, 0.0
      %v732 = vpack.c.bf16 %v729, %v728
      %v733 = vpack.c.bf16 %v731, %v730
      %734 = vst [vmem:[#allocation2 + $0x80] sm:$0xff] %v732
      %735 = vst [vmem:[#allocation2 + $0x88] sm:$0xff] %v733
      %v736 = vld [vmem:[#allocation2] sm:$0xff]
      %v737 = vld [vmem:[#allocation2 + $0x8] sm:$0xff]
      %v738 = vld [vmem:[#allocation2 + $0x10] sm:$0xff]
      %v739 = vld [vmem:[#allocation2 + $0x18] sm:$0xff]
      %v740 = vld [vmem:[#allocation2 + $0x20] sm:$0xff]
      %v741 = vld [vmem:[#allocation2 + $0x28] sm:$0xff]
      %v742 = vld [vmem:[#allocation2 + $0x30] sm:$0xff]
      %v743 = vld [vmem:[#allocation2 + $0x38] sm:$0xff]
      %v744 = vld [vmem:[#allocation2 + $0x40] sm:$0xff]
      %v745 = vld [vmem:[#allocation2 + $0x48] sm:$0xff]
      %v746 = vld [vmem:[#allocation2 + $0x50] sm:$0xff]
      %v747 = vld [vmem:[#allocation2 + $0x58] sm:$0xff]
      %v748 = vld [vmem:[#allocation2 + $0x60] sm:$0xff]
      %v749 = vld [vmem:[#allocation2 + $0x68] sm:$0xff]
      %v750 = vld [vmem:[#allocation2 + $0x70] sm:$0xff]
      %v751 = vld [vmem:[#allocation2 + $0x78] sm:$0xff]
      %v752 = vld [vmem:[#allocation2 + $0x80] sm:$0xff]
      %v753 = vld [vmem:[#allocation2 + $0x88] sm:$0xff]
      %v772 = vunpack.c.l.b16 %v736
      %v773 = vunpack.c.h.b16 %v736
      %v774 = vunpack.c.l.b16 %v737
      %v775 = vunpack.c.h.b16 %v737
      %v776 = vunpack.c.l.b16 %v738
      %v777 = vunpack.c.h.b16 %v738
      %v778 = vunpack.c.l.b16 %v739
      %v779 = vunpack.c.h.b16 %v739
      %v780 = vunpack.c.l.b16 %v740
      %v781 = vunpack.c.h.b16 %v740
      %v782 = vunpack.c.l.b16 %v741
      %v783 = vunpack.c.h.b16 %v741
      %v784 = vunpack.c.l.b16 %v742
      %v785 = vunpack.c.h.b16 %v742
      %v786 = vunpack.c.l.b16 %v743
      %v787 = vunpack.c.h.b16 %v743
      %v788 = vunpack.c.l.b16 %v744
      %v789 = vunpack.c.h.b16 %v744
      %v790 = vunpack.c.l.b16 %v745
      %v791 = vunpack.c.h.b16 %v745
      %v792 = vunpack.c.l.b16 %v746
      %v793 = vunpack.c.h.b16 %v746
      %v794 = vunpack.c.l.b16 %v747
      %v795 = vunpack.c.h.b16 %v747
      %v796 = vunpack.c.l.b16 %v748
      %v797 = vunpack.c.h.b16 %v748
      %v798 = vunpack.c.l.b16 %v749
      %v799 = vunpack.c.h.b16 %v749
      %v800 = vunpack.c.l.b16 %v750
      %v801 = vunpack.c.h.b16 %v750
      %v802 = vunpack.c.l.b16 %v751
      %v803 = vunpack.c.h.b16 %v751
      %v804 = vunpack.c.l.b16 %v752
      %v805 = vunpack.c.h.b16 %v752
      %v806 = vunpack.c.l.b16 %v753
      %v807 = vunpack.c.h.b16 %v753
      %v808 = vpack.c.b16 %v776, %v772
      %v809 = vpack.c.b16 %v777, %v773
      %v810 = vpack.c.b16 %v778, %v774
      %v811 = vpack.c.b16 %v779, %v775
      %v812 = vpack.c.b16 %v784, %v780
      %v813 = vpack.c.b16 %v785, %v781
      %v814 = vpack.c.b16 %v786, %v782
      %v815 = vpack.c.b16 %v787, %v783
      %v816 = vpack.c.b16 %v792, %v788
      %v817 = vpack.c.b16 %v793, %v789
      %v818 = vpack.c.b16 %v794, %v790
      %v819 = vpack.c.b16 %v795, %v791
      %v820 = vpack.c.b16 %v800, %v796
      %v821 = vpack.c.b16 %v801, %v797
      %v822 = vpack.c.b16 %v802, %v798
      %v823 = vpack.c.b16 %v803, %v799
      %v824 = vpack.c.b16 %v804, %v804
      %v825 = vpack.c.b16 %v805, %v805
      %v826 = vpack.c.b16 %v806, %v806
      %v827 = vpack.c.b16 %v807, %v807
      %vm844 = vcmask 588800
      %v846 = vsel %vm844, %v267, 0
      %v849 = vsel %vm346, %v824, 0
      %v852 = vsel %vm346, %v825, 0
      %v855 = vsel %vm346, %v826, 0
      %v858 = vsel %vm346, %v827, 0
      %860 = vmatpush.bf16.msra.mxu0 0
      %861 = vmatpush.bf16.msra.mxu0 0
      %862 = vmatpush.bf16.msra.mxu0 0
      %863 = vmatpush.bf16.msra.mxu0 %v849
      %864 = vmatpush.bf16.msra.mxu0 %v820
      %865 = vmatpush.bf16.msra.mxu0 %v816
      %866 = vmatpush.bf16.msra.mxu0 %v812
      %867 = vmatpush.bf16.msra.mxu0 %v808
      %868 = vmatmul.bf16.gmra.mxu0 %v846
      %v869 = vpop.f32.mrf.mxu0
      %v870 = vadd.f32 0.0, %v869
      %v871 = vpop.f32.mrf.mxu0
      %872 = vdwg.mxu0
      %873 = vmatpush.bf16.msra.mxu0 0
      %874 = vmatpush.bf16.msra.mxu0 0
      %875 = vmatpush.bf16.msra.mxu0 0
      %876 = vmatpush.bf16.msra.mxu0 %v852
      %877 = vmatpush.bf16.msra.mxu0 %v821
      %878 = vmatpush.bf16.msra.mxu0 %v817
      %879 = vmatpush.bf16.msra.mxu0 %v813
      %880 = vmatpush.bf16.msra.mxu0 %v809
      %881 = vmatmul.bf16.gmra.mxu0 %v846
      %v882 = vpop.f32.mrf.mxu0
      %v883 = vadd.f32 0.0, %v882
      %v884 = vpop.f32.mrf.mxu0
      %885 = vdwg.mxu0
      %886 = vmatpush.bf16.msra.mxu0 0
      %887 = vmatpush.bf16.msra.mxu0 0
      %888 = vmatpush.bf16.msra.mxu0 0
      %889 = vmatpush.bf16.msra.mxu0 %v855
      %890 = vmatpush.bf16.msra.mxu0 %v822
      %891 = vmatpush.bf16.msra.mxu0 %v818
      %892 = vmatpush.bf16.msra.mxu0 %v814
      %893 = vmatpush.bf16.msra.mxu0 %v810
      %894 = vmatmul.bf16.gmra.mxu0 %v846
      %v895 = vpop.f32.mrf.mxu0
      %v896 = vadd.f32 0.0, %v895
      %v897 = vpop.f32.mrf.mxu0
      %898 = vdwg.mxu0
      %899 = vmatpush.bf16.msra.mxu0 0
      %900 = vmatpush.bf16.msra.mxu0 0
      %901 = vmatpush.bf16.msra.mxu0 0
      %902 = vmatpush.bf16.msra.mxu0 %v858
      %903 = vmatpush.bf16.msra.mxu0 %v823
      %904 = vmatpush.bf16.msra.mxu0 %v819
      %905 = vmatpush.bf16.msra.mxu0 %v815
      %906 = vmatpush.bf16.msra.mxu0 %v811
      %907 = vmatmul.bf16.gmra.mxu0 %v846
      %v908 = vpop.f32.mrf.mxu0
      %v909 = vadd.f32 0.0, %v908
      %v910 = vpop.f32.mrf.mxu0
      %911 = vdwg.mxu0
      %913 = vset.pattern.permute.xlu0 0
      %914 = vperm.xlu0 %913, %v216
      %v915 = vpop.permute.xlu0 %914
      %v917 = vmul.f32 %v870, %v915
      %v918 = vmul.f32 %v883, %v915
      %v919 = vmul.f32 %v896, %v915
      %v920 = vmul.f32 %v909, %v915
      %922 = vset.pattern.permute.xlu0 0
      %923 = vperm.xlu0 %922, %v218
      %v924 = vpop.permute.xlu0 %923
      %v926 = vadd.f32 %v917, %v924
      %v927 = vadd.f32 %v918, %v924
      %v928 = vadd.f32 %v919, %v924
      %v929 = vadd.f32 %v920, %v924
      %v930 = vmax.f32 %v926, 0.0
      %v931 = vmax.f32 %v927, 0.0
      %v932 = vmax.f32 %v928, 0.0
      %v933 = vmax.f32 %v929, 0.0
      %s934 = scalar_lea.vmem %s1, 4
      %v935 = vld [vmem:[%s934] sm:$0xf]
      %936 = vrot.lane.b32.xlu0 %v930, 17
      %v937 = vpop.permute.xlu0 %936
      %938 = vrot.lane.b32.xlu0 %v931, 17
      %v939 = vpop.permute.xlu0 %938
      %940 = vrot.lane.b32.xlu0 %v932, 17
      %v941 = vpop.permute.xlu0 %940
      %942 = vrot.lane.b32.xlu0 %v933, 17
      %v943 = vpop.permute.xlu0 %942
      %v944 = vsel %vm278, %v941, %v943
      %v945 = vsel %vm278, %v939, %v941
      %v946 = vsel %vm278, %v937, %v939
      %v947 = vsel %vm278, %v943, %v937
      %v948 = vsel %vm288, %v947, 0.0
      %v949 = vsel %vm289, %v946, 0.0
      %v950 = vsel %vm290, %v945, 0.0
      %v951 = vsel %vm291, %v944, 0.0
      %v952 = vpack.c.bf16 %v949, %v948
      %v953 = vpack.c.bf16 %v951, %v950
      %954 = vrot.lane.b32.xlu0 %v930, 16
      %v955 = vpop.permute.xlu0 %954
      %956 = vrot.lane.b32.xlu0 %v931, 16
      %v957 = vpop.permute.xlu0 %956
      %958 = vrot.lane.b32.xlu0 %v932, 16
      %v959 = vpop.permute.xlu0 %958
      %960 = vrot.lane.b32.xlu0 %v933, 16
      %v961 = vpop.permute.xlu0 %960
      %v962 = vsel %vm306, %v959, %v961
      %v963 = vsel %vm306, %v957, %v959
      %v964 = vsel %vm306, %v955, %v957
      %v965 = vsel %vm306, %v961, %v955
      %v966 = vsel %vm316, %v965, 0.0
      %v967 = vsel %vm317, %v964, 0.0
      %v968 = vsel %vm318, %v963, 0.0
      %v969 = vsel %vm319, %v962, 0.0
      %v970 = vpack.c.bf16 %v967, %v966
      %v971 = vpack.c.bf16 %v969, %v968
      %v974 = vunpack.c.l.b16 %v952
      %v975 = vunpack.c.h.b16 %v952
      %v976 = vunpack.c.l.b16 %v953
      %v977 = vunpack.c.h.b16 %v953
      %v978 = vpack.c.b16 %v974, %v974
      %v979 = vpack.c.b16 %v975, %v975
      %v980 = vpack.c.b16 %v976, %v976
      %v981 = vpack.c.b16 %v977, %v977
      %v984 = vunpack.c.l.b16 %v970
      %v985 = vunpack.c.h.b16 %v970
      %v986 = vunpack.c.l.b16 %v971
      %v987 = vunpack.c.h.b16 %v971
      %v988 = vpack.c.b16 %v984, %v984
      %v989 = vpack.c.b16 %v985, %v985
      %v990 = vpack.c.b16 %v986, %v986
      %v991 = vpack.c.b16 %v987, %v987
      %v994 = vsel %vm346, %v978, %v988
      %v997 = vsel %vm346, %v979, %v989
      %v1000 = vsel %vm346, %v980, %v990
      %v1003 = vsel %vm346, %v981, %v991
      %v1008 = vunpack.c.l.b16 %v994
      %v1009 = vunpack.c.l.b16 %v997
      %v1010 = vunpack.c.l.b16 %v1000
      %v1011 = vunpack.c.l.b16 %v1003
      %v1012 = vunpack.c.h.b16 %v994
      %v1013 = vunpack.c.h.b16 %v997
      %v1014 = vunpack.c.h.b16 %v1000
      %v1015 = vunpack.c.h.b16 %v1003
      %v1016 = vpack.c.b16 %v1009, %v1008
      %v1017 = vpack.c.b16 %v1011, %v1010
      %v1018 = vpack.c.b16 %v1013, %v1012
      %v1019 = vpack.c.b16 %v1015, %v1014
      %1024 = vst [vmem:[#allocation2] sm:$0xff] %v1016
      %1025 = vst [vmem:[#allocation2 + $0x8] sm:$0xff] %v1017
      %1026 = vst [vmem:[#allocation2 + $0x10] sm:$0xff] %v1018
      %1027 = vst [vmem:[#allocation2 + $0x18] sm:$0xff] %v1019
      %1028 = vrot.lane.b32.xlu0 %v930, 15
      %v1029 = vpop.permute.xlu0 %1028
      %1030 = vrot.lane.b32.xlu0 %v931, 15
      %v1031 = vpop.permute.xlu0 %1030
      %1032 = vrot.lane.b32.xlu0 %v932, 15
      %v1033 = vpop.permute.xlu0 %1032
      %1034 = vrot.lane.b32.xlu0 %v933, 15
      %v1035 = vpop.permute.xlu0 %1034
      %v1036 = vsel %vm391, %v1033, %v1035
      %v1037 = vsel %vm391, %v1031, %v1033
      %v1038 = vsel %vm391, %v1029, %v1031
      %v1039 = vsel %vm391, %v1035, %v1029
      %v1040 = vsel %vm401, %v1039, 0.0
      %v1041 = vsel %vm402, %v1038, 0.0
      %v1042 = vsel %vm403, %v1037, 0.0
      %v1043 = vsel %vm404, %v1036, 0.0
      %v1044 = vpack.c.bf16 %v1041, %v1040
      %v1045 = vpack.c.bf16 %v1043, %v1042
      %1046 = vrot.lane.b32.xlu0 %v930, 1
      %v1047 = vpop.permute.xlu0 %1046
      %1048 = vrot.lane.b32.xlu0 %v931, 1
      %v1049 = vpop.permute.xlu0 %1048
      %1050 = vrot.lane.b32.xlu0 %v932, 1
      %v1051 = vpop.permute.xlu0 %1050
      %1052 = vrot.lane.b32.xlu0 %v933, 1
      %v1053 = vpop.permute.xlu0 %1052
      %v1054 = vsel %vm419, %v1051, %v1053
      %v1055 = vsel %vm419, %v1049, %v1051
      %v1056 = vsel %vm419, %v1047, %v1049
      %v1057 = vsel %vm419, %v1053, %v1047
      %v1058 = vsel %vm429, %v1057, 0.0
      %v1059 = vsel %vm430, %v1056, 0.0
      %v1060 = vsel %vm431, %v1055, 0.0
      %v1061 = vsel %vm432, %v1054, 0.0
      %v1062 = vpack.c.bf16 %v1059, %v1058
      %v1063 = vpack.c.bf16 %v1061, %v1060
      %v1066 = vunpack.c.l.b16 %v1044
      %v1067 = vunpack.c.h.b16 %v1044
      %v1068 = vunpack.c.l.b16 %v1045
      %v1069 = vunpack.c.h.b16 %v1045
      %v1070 = vpack.c.b16 %v1066, %v1066
      %v1071 = vpack.c.b16 %v1067, %v1067
      %v1072 = vpack.c.b16 %v1068, %v1068
      %v1073 = vpack.c.b16 %v1069, %v1069
      %v1076 = vunpack.c.l.b16 %v1062
      %v1077 = vunpack.c.h.b16 %v1062
      %v1078 = vunpack.c.l.b16 %v1063
      %v1079 = vunpack.c.h.b16 %v1063
      %v1080 = vpack.c.b16 %v1076, %v1076
      %v1081 = vpack.c.b16 %v1077, %v1077
      %v1082 = vpack.c.b16 %v1078, %v1078
      %v1083 = vpack.c.b16 %v1079, %v1079
      %v1086 = vsel %vm346, %v1070, %v1080
      %v1089 = vsel %vm346, %v1071, %v1081
      %v1092 = vsel %vm346, %v1072, %v1082
      %v1095 = vsel %vm346, %v1073, %v1083
      %v1100 = vunpack.c.l.b16 %v1086
      %v1101 = vunpack.c.l.b16 %v1089
      %v1102 = vunpack.c.l.b16 %v1092
      %v1103 = vunpack.c.l.b16 %v1095
      %v1104 = vunpack.c.h.b16 %v1086
      %v1105 = vunpack.c.h.b16 %v1089
      %v1106 = vunpack.c.h.b16 %v1092
      %v1107 = vunpack.c.h.b16 %v1095
      %v1108 = vpack.c.b16 %v1101, %v1100
      %v1109 = vpack.c.b16 %v1103, %v1102
      %v1110 = vpack.c.b16 %v1105, %v1104
      %v1111 = vpack.c.b16 %v1107, %v1106
      %1116 = vst [vmem:[#allocation2 + $0x20] sm:$0xff] %v1108
      %1117 = vst [vmem:[#allocation2 + $0x28] sm:$0xff] %v1109
      %1118 = vst [vmem:[#allocation2 + $0x30] sm:$0xff] %v1110
      %1119 = vst [vmem:[#allocation2 + $0x38] sm:$0xff] %v1111
      %v1120 = vsel %vm500, %v930, 0.0
      %v1121 = vsel %vm501, %v931, 0.0
      %v1122 = vsel %vm502, %v932, 0.0
      %v1123 = vsel %vm503, %v933, 0.0
      %v1124 = vpack.c.bf16 %v1121, %v1120
      %v1125 = vpack.c.bf16 %v1123, %v1122
      %1126 = vrot.lane.b32.xlu0 %v930, 127
      %v1127 = vpop.permute.xlu0 %1126
      %1128 = vrot.lane.b32.xlu0 %v931, 127
      %v1129 = vpop.permute.xlu0 %1128
      %1130 = vrot.lane.b32.xlu0 %v932, 127
      %v1131 = vpop.permute.xlu0 %1130
      %1132 = vrot.lane.b32.xlu0 %v933, 127
      %v1133 = vpop.permute.xlu0 %1132
      %v1134 = vsel %vm518, %v1131, %v1133
      %v1135 = vsel %vm518, %v1129, %v1131
      %v1136 = vsel %vm518, %v1127, %v1129
      %v1137 = vsel %vm518, %v1133, %v1127
      %v1138 = vsel %vm528, %v1136, 0.0
      %v1139 = vsel %vm529, %v1135, 0.0
      %v1140 = vsel %vm530, %v1134, 0.0
      %v1141 = vsel %vm531, %v1137, 0.0
      %v1142 = vpack.c.bf16 %v1139, %v1138
      %v1143 = vpack.c.bf16 %v1141, %v1140
      %v1146 = vunpack.c.l.b16 %v1124
      %v1147 = vunpack.c.h.b16 %v1124
      %v1148 = vunpack.c.l.b16 %v1125
      %v1149 = vunpack.c.h.b16 %v1125
      %v1150 = vpack.c.b16 %v1146, %v1146
      %v1151 = vpack.c.b16 %v1147, %v1147
      %v1152 = vpack.c.b16 %v1148, %v1148
      %v1153 = vpack.c.b16 %v1149, %v1149
      %v1156 = vunpack.c.l.b16 %v1142
      %v1157 = vunpack.c.h.b16 %v1142
      %v1158 = vunpack.c.l.b16 %v1143
      %v1159 = vunpack.c.h.b16 %v1143
      %v1160 = vpack.c.b16 %v1156, %v1156
      %v1161 = vpack.c.b16 %v1157, %v1157
      %v1162 = vpack.c.b16 %v1158, %v1158
      %v1163 = vpack.c.b16 %v1159, %v1159
      %v1166 = vsel %vm346, %v1150, %v1160
      %v1169 = vsel %vm346, %v1151, %v1161
      %v1172 = vsel %vm346, %v1152, %v1162
      %v1175 = vsel %vm346, %v1153, %v1163
      %v1180 = vunpack.c.l.b16 %v1166
      %v1181 = vunpack.c.l.b16 %v1169
      %v1182 = vunpack.c.l.b16 %v1172
      %v1183 = vunpack.c.l.b16 %v1175
      %v1184 = vunpack.c.h.b16 %v1166
      %v1185 = vunpack.c.h.b16 %v1169
      %v1186 = vunpack.c.h.b16 %v1172
      %v1187 = vunpack.c.h.b16 %v1175
      %v1188 = vpack.c.b16 %v1181, %v1180
      %v1189 = vpack.c.b16 %v1183, %v1182
      %v1190 = vpack.c.b16 %v1185, %v1184
      %v1191 = vpack.c.b16 %v1187, %v1186
      %1196 = vst [vmem:[#allocation2 + $0x40] sm:$0xff] %v1188
      %1197 = vst [vmem:[#allocation2 + $0x48] sm:$0xff] %v1189
      %1198 = vst [vmem:[#allocation2 + $0x50] sm:$0xff] %v1190
      %1199 = vst [vmem:[#allocation2 + $0x58] sm:$0xff] %v1191
      %1200 = vrot.lane.b32.xlu0 %v930, 113
      %v1201 = vpop.permute.xlu0 %1200
      %1202 = vrot.lane.b32.xlu0 %v931, 113
      %v1203 = vpop.permute.xlu0 %1202
      %1204 = vrot.lane.b32.xlu0 %v932, 113
      %v1205 = vpop.permute.xlu0 %1204
      %1206 = vrot.lane.b32.xlu0 %v933, 113
      %v1207 = vpop.permute.xlu0 %1206
      %v1208 = vsel %vm602, %v1205, %v1207
      %v1209 = vsel %vm602, %v1203, %v1205
      %v1210 = vsel %vm602, %v1201, %v1203
      %v1211 = vsel %vm602, %v1207, %v1201
      %v1212 = vsel %vm612, %v1210, 0.0
      %v1213 = vsel %vm613, %v1209, 0.0
      %v1214 = vsel %vm614, %v1208, 0.0
      %v1215 = vsel %vm615, %v1211, 0.0
      %v1216 = vpack.c.bf16 %v1213, %v1212
      %v1217 = vpack.c.bf16 %v1215, %v1214
      %1218 = vrot.lane.b32.xlu0 %v930, 112
      %v1219 = vpop.permute.xlu0 %1218
      %1220 = vrot.lane.b32.xlu0 %v931, 112
      %v1221 = vpop.permute.xlu0 %1220
      %1222 = vrot.lane.b32.xlu0 %v932, 112
      %v1223 = vpop.permute.xlu0 %1222
      %1224 = vrot.lane.b32.xlu0 %v933, 112
      %v1225 = vpop.permute.xlu0 %1224
      %v1226 = vsel %vm630, %v1223, %v1225
      %v1227 = vsel %vm630, %v1221, %v1223
      %v1228 = vsel %vm630, %v1219, %v1221
      %v1229 = vsel %vm630, %v1225, %v1219
      %v1230 = vsel %vm640, %v1228, 0.0
      %v1231 = vsel %vm641, %v1227, 0.0
      %v1232 = vsel %vm642, %v1226, 0.0
      %v1233 = vsel %vm643, %v1229, 0.0
      %v1234 = vpack.c.bf16 %v1231, %v1230
      %v1235 = vpack.c.bf16 %v1233, %v1232
      %v1238 = vunpack.c.l.b16 %v1216
      %v1239 = vunpack.c.h.b16 %v1216
      %v1240 = vunpack.c.l.b16 %v1217
      %v1241 = vunpack.c.h.b16 %v1217
      %v1242 = vpack.c.b16 %v1238, %v1238
      %v1243 = vpack.c.b16 %v1239, %v1239
      %v1244 = vpack.c.b16 %v1240, %v1240
      %v1245 = vpack.c.b16 %v1241, %v1241
      %v1248 = vunpack.c.l.b16 %v1234
      %v1249 = vunpack.c.h.b16 %v1234
      %v1250 = vunpack.c.l.b16 %v1235
      %v1251 = vunpack.c.h.b16 %v1235
      %v1252 = vpack.c.b16 %v1248, %v1248
      %v1253 = vpack.c.b16 %v1249, %v1249
      %v1254 = vpack.c.b16 %v1250, %v1250
      %v1255 = vpack.c.b16 %v1251, %v1251
      %v1258 = vsel %vm346, %v1242, %v1252
      %v1261 = vsel %vm346, %v1243, %v1253
      %v1264 = vsel %vm346, %v1244, %v1254
      %v1267 = vsel %vm346, %v1245, %v1255
      %v1272 = vunpack.c.l.b16 %v1258
      %v1273 = vunpack.c.l.b16 %v1261
      %v1274 = vunpack.c.l.b16 %v1264
      %v1275 = vunpack.c.l.b16 %v1267
      %v1276 = vunpack.c.h.b16 %v1258
      %v1277 = vunpack.c.h.b16 %v1261
      %v1278 = vunpack.c.h.b16 %v1264
      %v1279 = vunpack.c.h.b16 %v1267
      %v1280 = vpack.c.b16 %v1273, %v1272
      %v1281 = vpack.c.b16 %v1275, %v1274
      %v1282 = vpack.c.b16 %v1277, %v1276
      %v1283 = vpack.c.b16 %v1279, %v1278
      %1288 = vst [vmem:[#allocation2 + $0x60] sm:$0xff] %v1280
      %1289 = vst [vmem:[#allocation2 + $0x68] sm:$0xff] %v1281
      %1290 = vst [vmem:[#allocation2 + $0x70] sm:$0xff] %v1282
      %1291 = vst [vmem:[#allocation2 + $0x78] sm:$0xff] %v1283
      %1292 = vrot.lane.b32.xlu0 %v930, 111
      %v1293 = vpop.permute.xlu0 %1292
      %1294 = vrot.lane.b32.xlu0 %v931, 111
      %v1295 = vpop.permute.xlu0 %1294
      %1296 = vrot.lane.b32.xlu0 %v932, 111
      %v1297 = vpop.permute.xlu0 %1296
      %1298 = vrot.lane.b32.xlu0 %v933, 111
      %v1299 = vpop.permute.xlu0 %1298
      %v1300 = vsel %vm714, %v1297, %v1299
      %v1301 = vsel %vm714, %v1295, %v1297
      %v1302 = vsel %vm714, %v1293, %v1295
      %v1303 = vsel %vm714, %v1299, %v1293
      %v1304 = vsel %vm724, %v1302, 0.0
      %v1305 = vsel %vm725, %v1301, 0.0
      %v1306 = vsel %vm726, %v1300, 0.0
      %v1307 = vsel %vm727, %v1303, 0.0
      %v1308 = vpack.c.bf16 %v1305, %v1304
      %v1309 = vpack.c.bf16 %v1307, %v1306
      %1310 = vst [vmem:[#allocation2 + $0x80] sm:$0xff] %v1308
      %1311 = vst [vmem:[#allocation2 + $0x88] sm:$0xff] %v1309
      %v1312 = vld [vmem:[#allocation2] sm:$0xff]
      %v1313 = vld [vmem:[#allocation2 + $0x8] sm:$0xff]
      %v1314 = vld [vmem:[#allocation2 + $0x10] sm:$0xff]
      %v1315 = vld [vmem:[#allocation2 + $0x18] sm:$0xff]
      %v1316 = vld [vmem:[#allocation2 + $0x20] sm:$0xff]
      %v1317 = vld [vmem:[#allocation2 + $0x28] sm:$0xff]
      %v1318 = vld [vmem:[#allocation2 + $0x30] sm:$0xff]
      %v1319 = vld [vmem:[#allocation2 + $0x38] sm:$0xff]
      %v1320 = vld [vmem:[#allocation2 + $0x40] sm:$0xff]
      %v1321 = vld [vmem:[#allocation2 + $0x48] sm:$0xff]
      %v1322 = vld [vmem:[#allocation2 + $0x50] sm:$0xff]
      %v1323 = vld [vmem:[#allocation2 + $0x58] sm:$0xff]
      %v1324 = vld [vmem:[#allocation2 + $0x60] sm:$0xff]
      %v1325 = vld [vmem:[#allocation2 + $0x68] sm:$0xff]
      %v1326 = vld [vmem:[#allocation2 + $0x70] sm:$0xff]
      %v1327 = vld [vmem:[#allocation2 + $0x78] sm:$0xff]
      %v1328 = vld [vmem:[#allocation2 + $0x80] sm:$0xff]
      %v1329 = vld [vmem:[#allocation2 + $0x88] sm:$0xff]
      %v1348 = vunpack.c.l.b16 %v1312
      %v1349 = vunpack.c.h.b16 %v1312
      %v1350 = vunpack.c.l.b16 %v1313
      %v1351 = vunpack.c.h.b16 %v1313
      %v1352 = vunpack.c.l.b16 %v1314
      %v1353 = vunpack.c.h.b16 %v1314
      %v1354 = vunpack.c.l.b16 %v1315
      %v1355 = vunpack.c.h.b16 %v1315
      %v1356 = vunpack.c.l.b16 %v1316
      %v1357 = vunpack.c.h.b16 %v1316
      %v1358 = vunpack.c.l.b16 %v1317
      %v1359 = vunpack.c.h.b16 %v1317
      %v1360 = vunpack.c.l.b16 %v1318
      %v1361 = vunpack.c.h.b16 %v1318
      %v1362 = vunpack.c.l.b16 %v1319
      %v1363 = vunpack.c.h.b16 %v1319
      %v1364 = vunpack.c.l.b16 %v1320
      %v1365 = vunpack.c.h.b16 %v1320
      %v1366 = vunpack.c.l.b16 %v1321
      %v1367 = vunpack.c.h.b16 %v1321
      %v1368 = vunpack.c.l.b16 %v1322
      %v1369 = vunpack.c.h.b16 %v1322
      %v1370 = vunpack.c.l.b16 %v1323
      %v1371 = vunpack.c.h.b16 %v1323
      %v1372 = vunpack.c.l.b16 %v1324
      %v1373 = vunpack.c.h.b16 %v1324
      %v1374 = vunpack.c.l.b16 %v1325
      %v1375 = vunpack.c.h.b16 %v1325
      %v1376 = vunpack.c.l.b16 %v1326
      %v1377 = vunpack.c.h.b16 %v1326
      %v1378 = vunpack.c.l.b16 %v1327
      %v1379 = vunpack.c.h.b16 %v1327
      %v1380 = vunpack.c.l.b16 %v1328
      %v1381 = vunpack.c.h.b16 %v1328
      %v1382 = vunpack.c.l.b16 %v1329
      %v1383 = vunpack.c.h.b16 %v1329
      %v1384 = vpack.c.b16 %v1352, %v1348
      %v1385 = vpack.c.b16 %v1353, %v1349
      %v1386 = vpack.c.b16 %v1354, %v1350
      %v1387 = vpack.c.b16 %v1355, %v1351
      %v1388 = vpack.c.b16 %v1360, %v1356
      %v1389 = vpack.c.b16 %v1361, %v1357
      %v1390 = vpack.c.b16 %v1362, %v1358
      %v1391 = vpack.c.b16 %v1363, %v1359
      %v1392 = vpack.c.b16 %v1368, %v1364
      %v1393 = vpack.c.b16 %v1369, %v1365
      %v1394 = vpack.c.b16 %v1370, %v1366
      %v1395 = vpack.c.b16 %v1371, %v1367
      %v1396 = vpack.c.b16 %v1376, %v1372
      %v1397 = vpack.c.b16 %v1377, %v1373
      %v1398 = vpack.c.b16 %v1378, %v1374
      %v1399 = vpack.c.b16 %v1379, %v1375
      %v1400 = vpack.c.b16 %v1380, %v1380
      %v1401 = vpack.c.b16 %v1381, %v1381
      %v1402 = vpack.c.b16 %v1382, %v1382
      %v1403 = vpack.c.b16 %v1383, %v1383
      %v1421 = vsel %vm844, %v935, 0
      %v1424 = vsel %vm346, %v1400, 0
      %v1427 = vsel %vm346, %v1401, 0
      %v1430 = vsel %vm346, %v1402, 0
      %v1433 = vsel %vm346, %v1403, 0
      %1435 = vmatpush.bf16.msra.mxu0 0
      %1436 = vmatpush.bf16.msra.mxu0 0
      %1437 = vmatpush.bf16.msra.mxu0 0
      %1438 = vmatpush.bf16.msra.mxu0 %v1424
      %1439 = vmatpush.bf16.msra.mxu0 %v1396
      %1440 = vmatpush.bf16.msra.mxu0 %v1392
      %1441 = vmatpush.bf16.msra.mxu0 %v1388
      %1442 = vmatpush.bf16.msra.mxu0 %v1384
      %1443 = vmatmul.bf16.gmra.mxu0 %v1421
      %v1444 = vpop.f32.mrf.mxu0
      %v1445 = vadd.f32 %v207, %v1444
      %v1446 = vpop.f32.mrf.mxu0
      %1447 = vdwg.mxu0
      %1448 = vmatpush.bf16.msra.mxu0 0
      %1449 = vmatpush.bf16.msra.mxu0 0
      %1450 = vmatpush.bf16.msra.mxu0 0
      %1451 = vmatpush.bf16.msra.mxu0 %v1427
      %1452 = vmatpush.bf16.msra.mxu0 %v1397
      %1453 = vmatpush.bf16.msra.mxu0 %v1393
      %1454 = vmatpush.bf16.msra.mxu0 %v1389
      %1455 = vmatpush.bf16.msra.mxu0 %v1385
      %1456 = vmatmul.bf16.gmra.mxu0 %v1421
      %v1457 = vpop.f32.mrf.mxu0
      %v1458 = vadd.f32 %v208, %v1457
      %v1459 = vpop.f32.mrf.mxu0
      %1460 = vdwg.mxu0
      %1461 = vmatpush.bf16.msra.mxu0 0
      %1462 = vmatpush.bf16.msra.mxu0 0
      %1463 = vmatpush.bf16.msra.mxu0 0
      %1464 = vmatpush.bf16.msra.mxu0 %v1430
      %1465 = vmatpush.bf16.msra.mxu0 %v1398
      %1466 = vmatpush.bf16.msra.mxu0 %v1394
      %1467 = vmatpush.bf16.msra.mxu0 %v1390
      %1468 = vmatpush.bf16.msra.mxu0 %v1386
      %1469 = vmatmul.bf16.gmra.mxu0 %v1421
      %v1470 = vpop.f32.mrf.mxu0
      %v1471 = vadd.f32 %v210, %v1470
      %v1472 = vpop.f32.mrf.mxu0
      %1473 = vdwg.mxu0
      %1474 = vmatpush.bf16.msra.mxu0 0
      %1475 = vmatpush.bf16.msra.mxu0 0
      %1476 = vmatpush.bf16.msra.mxu0 0
      %1477 = vmatpush.bf16.msra.mxu0 %v1433
      %1478 = vmatpush.bf16.msra.mxu0 %v1399
      %1479 = vmatpush.bf16.msra.mxu0 %v1395
      %1480 = vmatpush.bf16.msra.mxu0 %v1391
      %1481 = vmatpush.bf16.msra.mxu0 %v1387
      %1482 = vmatmul.bf16.gmra.mxu0 %v1421
      %v1483 = vpop.f32.mrf.mxu0
      %v1484 = vadd.f32 %v211, %v1483
      %v1485 = vpop.f32.mrf.mxu0
      %1486 = vdwg.mxu0
      %1487 = vst [vmem:[%s204] sm:$0xff] %v1445
      %1488 = vst [vmem:[%s204 + $0x8] sm:$0xff] %v1458
      %s1489 = scalar_lea.vmem %s204, 16
      %1490 = vst [vmem:[%s1489] sm:$0xff] %v1471
      %1491 = vst [vmem:[%s1489 + $0x8] sm:$0xff] %v1484
      %s1492 = smul.u32 2, %s15
      %p1493 = scmp.lt.s32.totalorder %s1492, 3
      %s1494 = scalar_select %p1493, %s1492, 3
      %s1495 = smul.addr %s1494, 2
      %s1496 = smul.addr %s1495, 8
      %s1497 = scalar_lea.vmem %s4, %s1496
      // Predicated region
      $region37: #{residual_block_nchw.1} parent=35 // pred_check
        %p1498 = pneg %p122
      $region38: #{residual_block_nchw.1} parent=35 // pred_check_branch
        %1500 = sbr.rel (%p1498) target = $region40
      $region39: #{residual_block_nchw.1} parent=35 // pred_region
        %s1501 = smul.u32 2, %s15
      $region40: #{residual_block_nchw.1} parent=35 // pred_fallthru
        _
    $region36: #{residual_block_nchw.1} parent=5 // pred_fallthru
      _
    %p1502 = scmp.le.s32.totalorder 2, %s10
    // Predicated region
    $region41: #{residual_block_nchw.1} parent=5 // pred_check
      %p1503 = pneg %p1502
    $region42: #{residual_block_nchw.1} parent=5 // pred_check_branch
      %1505 = sbr.rel (%p1503) target = $region44
    $region43: #{residual_block_nchw.1} parent=5 // pred_region
      %s1506 = ssub.s32 %s10, 2
      // Predicated region
      $region45: #{residual_block_nchw.1} parent=43 // pred_check
        %p1507 = pneg %p128
      $region46: #{residual_block_nchw.1} parent=43 // pred_check_branch
        %1509 = sbr.rel (%p1507) target = $region48
      $region47: #{residual_block_nchw.1} parent=43 // pred_region
        %s1510 = smul.u32 2, %s16
        %p1511 = scmp.lt.s32.totalorder %s1510, 3
        %s1512 = scalar_select %p1511, %s1510, 3
        %s1513 = smul.addr %s1512, 2
        %s1514 = smul.addr %s1513, 8
        %s1515 = scalar_lea.vmem %s4, %s1514
      $region48: #{residual_block_nchw.1} parent=43 // pred_fallthru
        _
    $region44: #{residual_block_nchw.1} parent=5 // pred_fallthru
      _
  $region6: #{residual_block_nchw.1} parent=0 // loop_footer
    %s14 = sadd.s32 1, %s10
  $region7: #{residual_block_nchw.1} parent=0 // loop_footer_branch
    %9 = sbr.rel target = $region3
  $region8: #{residual_block_nchw.1} parent=0 // loop_exit
    _

</llo_original>
